<compile_context>
chip_gen: v5e
topology: v5e:2x2
jax: 0.10.0
libtpu: 0.0.40
codegen_flags: <defaults>
</compile_context>

<pallas_src>
import functools

import jax
import jax.numpy as jnp
from jax.experimental import pallas as pl
from jax.experimental.pallas import tpu as pltpu


_NEG_SLOPE = 0.01  # PyTorch nn.LeakyReLU default negative_slope


def _fused_mlp_kernel(*refs, layer_has_scale, neg_slope):
    """Whole MLP in one kernel; everything resident in VMEM.

    refs = (x_ref, [w0, (scale0), b0], [w1, (scale1), b1], ..., o_ref)
    A layer carries a scale ref iff layer_has_scale[i] is True (int8 weight).
    Activations feed the MXU in bf16; accumulation / scale / bias / LeakyReLU in f32.
    """
    x_ref = refs[0]
    o_ref = refs[-1]
    n_layers = len(layer_has_scale)

    h = x_ref[...]
    if h.dtype != jnp.bfloat16:
        h = h.astype(jnp.bfloat16)          # in-kernel cast, hidden under weight DMA

    idx = 1
    for i, has_scale in enumerate(layer_has_scale):
        w_ref = refs[idx]
        idx += 1
        s_ref = None
        if has_scale:
            s_ref = refs[idx]
            idx += 1
        b_ref = refs[idx]
        idx += 1

        w = w_ref[...]
        if w.dtype != jnp.bfloat16:
            # int8 per-output-channel quantized weight: dequant is a cast only;
            # the per-channel scale is applied to the f32 accumulator below.
            w = w.astype(jnp.float32).astype(jnp.bfloat16)

        y = jnp.dot(h, w, preferred_element_type=jnp.float32)
        if s_ref is not None:
            y = y * s_ref[...]               # (1, F_out) f32 per-channel scale
        y = y + b_ref[...]

        if i != n_layers - 1:
            y = jnp.where(y > 0, y, neg_slope * y)   # LeakyReLU on the VPU
            h = y.astype(jnp.bfloat16)               # bf16 into the next MXU pass
        else:
            h = y                                    # final logits stay f32

    o_ref[...] = h.astype(o_ref.dtype)


def domain_discriminator_forward_padded(x, kernel_params):
    """Fused forward pass. x: (B, 2048) f32.

    Returns (B, n_pad) f32 logits where n_pad is the lane-padded output width
    (multiple of 128); columns >= num_domains are exact zeros of the padded
    weights/biases.  Consumers should mask/ignore them in place rather than
    paying a separate slice op.
    """
    B = x.shape[0]
    n_pad = kernel_params[-1][0].shape[1]

    flat_params = []
    layer_has_scale = []
    for w, s, b in kernel_params:
        layer_has_scale.append(s is not None)
        flat_params.append(w)
        if s is not None:
            flat_params.append(s)
        flat_params.append(b)
    n_inputs = 1 + len(flat_params)

    flops = 2 * B * sum(int(w.shape[0]) * int(w.shape[1]) for w, _, _ in kernel_params)
    bytes_in = int(x.size) * x.dtype.itemsize + sum(
        int(a.size) * a.dtype.itemsize for a in flat_params
    )
    bytes_out = B * n_pad * 4
    cost = pl.CostEstimate(
        flops=flops, transcendentals=0, bytes_accessed=bytes_in + bytes_out
    )

    kernel = functools.partial(
        _fused_mlp_kernel,
        layer_has_scale=tuple(layer_has_scale),
        neg_slope=_NEG_SLOPE,
    )

    # Grid-less call: single invocation, whole arrays in VMEM, no pipeline
    # double-buffering.  (Everything fits with huge margin on v5e/v6e/v7x.)
    return pl.pallas_call(
        kernel,
        out_shape=jax.ShapeDtypeStruct((B, n_pad), jnp.float32),
        in_specs=[pl.BlockSpec(memory_space=pltpu.MemorySpace.VMEM)] * n_inputs,
        out_specs=pl.BlockSpec(memory_space=pltpu.MemorySpace.VMEM),
        cost_estimate=cost,
    )(x, *flat_params)


def domain_discriminator_forward(x, kernel_params, num_domains):
    """Module-semantics convenience wrapper: (B, num_domains) f32 logits.

    Prefer domain_discriminator_forward_padded + in-consumer masking in production
    (the trailing slice is a standalone XLA op comparable in cost to the kernel).
    """
    return domain_discriminator_forward_padded(x, kernel_params)[:, :num_domains]


def init_domain_discriminator_params(key, in_features, hidden_layers, num_domains):
    """Deterministic PyTorch-style (uniform +-1/sqrt(fan_in)) Linear init, f32."""
    dims = [in_features] + list(hidden_layers) + [num_domains]
    params = []
    for i in range(len(dims) - 1):
        fan_in, fan_out = dims[i], dims[i + 1]
        key, kw, kb = jax.random.split(key, 3)
        bound = 1.0 / jnp.sqrt(jnp.float32(fan_in))
        w = jax.random.uniform(
            kw, (fan_in, fan_out), jnp.float32, minval=-bound, maxval=bound
        )
        b = jax.random.uniform(
            kb, (fan_out,), jnp.float32, minval=-bound, maxval=bound
        )
        params.append((w, b))
    return params


def _quantize_per_channel_int8(w):
    """Symmetric per-output-channel int8 quantization of an (F_in, F_out) f32 weight."""
    amax = jnp.max(jnp.abs(w), axis=0, keepdims=True)            # (1, F_out)
    scale = jnp.maximum(amax, 1e-8) / 127.0
    q = jnp.clip(jnp.round(w / scale), -127.0, 127.0).astype(jnp.int8)
    return q, scale.astype(jnp.float32)


def pack_params_for_kernel(params, lane_pad=128, quantize_first_layer=True):
    """Kernel layout: per layer (weight, scale_or_None, (1, N) f32 bias).

    Layer 0 (the dominant ~1 MiB transfer) is int8 + per-channel f32 scale;
    remaining layers are bf16.  The last layer is zero-padded to lane_pad columns
    so the output store is lane-dense.
    """
    packed = []
    n = len(params)
    for i, (w, b) in enumerate(params):
        wk = w
        bk = b.reshape(1, -1).astype(jnp.float32)
        if i == n - 1:
            n_out = w.shape[1]
            n_padded = max(lane_pad, ((n_out + lane_pad - 1) // lane_pad) * lane_pad)
            if n_padded != n_out:
                wk = jnp.zeros((w.shape[0], n_padded), w.dtype).at[:, :n_out].set(wk)
                bk = jnp.zeros((1, n_padded), jnp.float32).at[:, :n_out].set(bk)
        if i == 0 and quantize_first_layer:
            q, scale = _quantize_per_channel_int8(wk)
            packed.append((q, scale, bk))
        else:
            packed.append((wk.astype(jnp.bfloat16), None, bk))
    return packed


def domain_discriminator_ref_packed(x, kernel_params):
    """jnp reference using exactly the kernel's packed params & casting sequence."""
    n = len(kernel_params)
    h = x.astype(jnp.bfloat16)
    for i, (w, s, b) in enumerate(kernel_params):
        if w.dtype != jnp.bfloat16:
            w = w.astype(jnp.float32).astype(jnp.bfloat16)
        y = jnp.dot(h, w, preferred_element_type=jnp.float32)
        if s is not None:
            y = y * s
        y = y + b
        if i != n - 1:
            y = jnp.where(y > 0, y, _NEG_SLOPE * y)
            h = y.astype(jnp.bfloat16)
        else:
            h = y
    return h


def domain_discriminator_ref_f32(x, params):
    """Full-f32 reference (mirrors the PyTorch module in eval mode)."""
    n = len(params)
    h = x
    for i, (w, b) in enumerate(params):
        h = h @ w + b
        if i != n - 1:
            h = jnp.where(h > 0, h, _NEG_SLOPE * h)
    return h


if __name__ == "__main__":
    # Module semantics: input features fixed at 2048 (ResNet-50 embedding);
    # args.ddisc_layers -> hidden sizes; output = number of domains.
    B = 16                      # e.g. both MoCo branches concatenated (amortizes the
                                # weight load and fills bf16 sublane packing)
    IN_FEATURES = 2048          # hard-coded prev_n_f in the module
    HIDDEN = (256, 128)         # args.ddisc_layers = "256,128"
    NUM_DOMAINS = 3             # args.data = "a,b,c"

    key = jax.random.PRNGKey(0)
    key, kx = jax.random.split(key)
    x = jax.random.normal(kx, (B, IN_FEATURES), dtype=jnp.float32)

    params = init_domain_discriminator_params(key, IN_FEATURES, HIDDEN, NUM_DOMAINS)
    kernel_params = pack_params_for_kernel(params)

    out_padded = domain_discriminator_forward_padded(x, kernel_params)
    out_padded = jax.block_until_ready(out_padded)
    assert out_padded.shape == (B, 128), out_padded.shape

    # Test-only trim to module shape; in production fuse/mask inside the consumer.
    out = out_padded[:, :NUM_DOMAINS]
    assert out.shape == (B, NUM_DOMAINS), out.shape

    # Tight check against a jnp reference using the SAME packed params / casts.
    ref_match = domain_discriminator_ref_packed(x, kernel_params)[:, :NUM_DOMAINS]
    assert jnp.allclose(out, ref_match, atol=1e-2, rtol=1e-2), "mismatch vs packed ref"

    # Loose check against the pure-f32 reference (module semantics; bf16 + int8
    # per-channel quantization of layer 0 introduce only small rounding error).
    ref_f32 = domain_discriminator_ref_f32(x, params)
    assert jnp.allclose(out, ref_f32, atol=1e-1, rtol=1e-1), "mismatch vs f32 reference"

    print("KERNEL_OK")
</pallas_src>

<mosaic_0001>
module attributes {stable_mosaic.version = 11 : i64} {
  func.func @_fused_mlp_kernel(%arg0: memref<16x2048xf32, #tpu.memory_space<vmem>>, %arg1: memref<2048x256xi8, #tpu.memory_space<vmem>>, %arg2: memref<1x256xf32, #tpu.memory_space<vmem>>, %arg3: memref<1x256xf32, #tpu.memory_space<vmem>>, %arg4: memref<256x128xbf16, #tpu.memory_space<vmem>>, %arg5: memref<1x128xf32, #tpu.memory_space<vmem>>, %arg6: memref<128x128xbf16, #tpu.memory_space<vmem>>, %arg7: memref<1x128xf32, #tpu.memory_space<vmem>>, %arg8: memref<16x128xf32, #tpu.memory_space<vmem>>) attributes {dimension_semantics = [], scalar_prefetch = 0 : i64, scratch_operands = 0 : i64, tpu.core_type = #tpu.core_type<tc>} {
    %c0 = arith.constant 0 : index
    %c0_0 = arith.constant 0 : index
    %0 = vector.load %arg0[%c0, %c0_0] : memref<16x2048xf32, #tpu.memory_space<vmem>>, vector<16x2048xf32>
    %1 = arith.truncf %0 : vector<16x2048xf32> to vector<16x2048xbf16>
    %c0_1 = arith.constant 0 : index
    %c0_2 = arith.constant 0 : index
    %2 = vector.load %arg1[%c0_1, %c0_2] : memref<2048x256xi8, #tpu.memory_space<vmem>>, vector<2048x256xi8>
    %3 = arith.sitofp %2 : vector<2048x256xi8> to vector<2048x256xf32>
    %4 = arith.truncf %3 : vector<2048x256xf32> to vector<2048x256xbf16>
    %cst = arith.constant dense<0.000000e+00> : vector<16x256xf32>
    %5 = tpu.matmul %1, %4, %cst {dimension_numbers = #tpu.dot_dimension_numbers<[1], [0], [0], [1], [0, 0, 1, 1], [], []>} : vector<16x2048xbf16>, vector<2048x256xbf16>, vector<16x256xf32> -> vector<16x256xf32>
    %c0_3 = arith.constant 0 : index
    %c0_4 = arith.constant 0 : index
    %6 = vector.load %arg2[%c0_3, %c0_4] : memref<1x256xf32, #tpu.memory_space<vmem>>, vector<1x256xf32>
    %7 = vector.broadcast %6 : vector<1x256xf32> to vector<16x256xf32>
    %8 = arith.mulf %5, %7 : vector<16x256xf32>
    %c0_5 = arith.constant 0 : index
    %c0_6 = arith.constant 0 : index
    %9 = vector.load %arg3[%c0_5, %c0_6] : memref<1x256xf32, #tpu.memory_space<vmem>>, vector<1x256xf32>
    %10 = vector.broadcast %9 : vector<1x256xf32> to vector<16x256xf32>
    %11 = arith.addf %8, %10 : vector<16x256xf32>
    %cst_7 = arith.constant 0.000000e+00 : f32
    %12 = vector.broadcast %cst_7 : f32 to vector<16x256xf32>
    %13 = arith.cmpf ogt, %11, %12 : vector<16x256xf32>
    %cst_8 = arith.constant 0.00999999977 : f32
    %14 = vector.broadcast %cst_8 : f32 to vector<16x256xf32>
    %15 = arith.mulf %14, %11 : vector<16x256xf32>
    %16 = arith.select %13, %11, %15 : vector<16x256xi1>, vector<16x256xf32>
    %17 = arith.truncf %16 : vector<16x256xf32> to vector<16x256xbf16>
    %c0_9 = arith.constant 0 : index
    %c0_10 = arith.constant 0 : index
    %18 = vector.load %arg4[%c0_9, %c0_10] : memref<256x128xbf16, #tpu.memory_space<vmem>>, vector<256x128xbf16>
    %cst_11 = arith.constant dense<0.000000e+00> : vector<16x128xf32>
    %19 = tpu.matmul %17, %18, %cst_11 {dimension_numbers = #tpu.dot_dimension_numbers<[1], [0], [0], [1], [0, 0, 1, 1], [], []>} : vector<16x256xbf16>, vector<256x128xbf16>, vector<16x128xf32> -> vector<16x128xf32>
    %c0_12 = arith.constant 0 : index
    %c0_13 = arith.constant 0 : index
    %20 = vector.load %arg5[%c0_12, %c0_13] : memref<1x128xf32, #tpu.memory_space<vmem>>, vector<1x128xf32>
    %21 = vector.broadcast %20 : vector<1x128xf32> to vector<16x128xf32>
    %22 = arith.addf %19, %21 : vector<16x128xf32>
    %cst_14 = arith.constant 0.000000e+00 : f32
    %23 = vector.broadcast %cst_14 : f32 to vector<16x128xf32>
    %24 = arith.cmpf ogt, %22, %23 : vector<16x128xf32>
    %cst_15 = arith.constant 0.00999999977 : f32
    %25 = vector.broadcast %cst_15 : f32 to vector<16x128xf32>
    %26 = arith.mulf %25, %22 : vector<16x128xf32>
    %27 = arith.select %24, %22, %26 : vector<16x128xi1>, vector<16x128xf32>
    %28 = arith.truncf %27 : vector<16x128xf32> to vector<16x128xbf16>
    %c0_16 = arith.constant 0 : index
    %c0_17 = arith.constant 0 : index
    %29 = vector.load %arg6[%c0_16, %c0_17] : memref<128x128xbf16, #tpu.memory_space<vmem>>, vector<128x128xbf16>
    %cst_18 = arith.constant dense<0.000000e+00> : vector<16x128xf32>
    %30 = tpu.matmul %28, %29, %cst_18 {dimension_numbers = #tpu.dot_dimension_numbers<[1], [0], [0], [1], [0, 0, 1, 1], [], []>} : vector<16x128xbf16>, vector<128x128xbf16>, vector<16x128xf32> -> vector<16x128xf32>
    %c0_19 = arith.constant 0 : index
    %c0_20 = arith.constant 0 : index
    %31 = vector.load %arg7[%c0_19, %c0_20] : memref<1x128xf32, #tpu.memory_space<vmem>>, vector<1x128xf32>
    %32 = vector.broadcast %31 : vector<1x128xf32> to vector<16x128xf32>
    %33 = arith.addf %30, %32 : vector<16x128xf32>
    %c0_21 = arith.constant 0 : index
    %c0_22 = arith.constant 0 : index
    %34 = vector.load %arg8[%c0_21, %c0_22] : memref<16x128xf32, #tpu.memory_space<vmem>>, vector<16x128xf32>
    tpu.vector_store %arg8[%c0_21, %c0_22], %33 {strides = array<i32>} : memref<16x128xf32, #tpu.memory_space<vmem>>, vector<16x128xf32>,
    return
  }
}

</mosaic_0001>

<llo_original>
// kernel: tpu_custom_call.1
$region0: #{tpu_custom_call.1}
  #allocation0 [shape = 'u32[]', space=smem, size = 0x4, offset = 0x4, fixed_abs, tag = 'smem constant byte address 0x4 - core index']
  #allocation1 [shape = 'u32[72,128]{1,0:T(1,128)}', space=vmem, size = 0x9000, scoped, tag = 'internal scratch']
  %s0 = inlined_call_operand.hbm [shape: f32[16,2048], index: 0, kind: input, shape index: {}]
  %s1 = inlined_call_operand.hbm [shape: s8[2048,256], index: 1, kind: input, shape index: {}]
  %s2 = inlined_call_operand.hbm [shape: f32[1,256], index: 2, kind: input, shape index: {}]
  %s3 = inlined_call_operand.vmem [shape: f32[1,256], index: 3, kind: input, shape index: {}]
  %s4 = inlined_call_operand.hbm [shape: bf16[256,128], index: 4, kind: input, shape index: {}]
  %s5 = inlined_call_operand.vmem [shape: f32[1,128], index: 5, kind: input, shape index: {}]
  %s6 = inlined_call_operand.hbm [shape: bf16[128,128], index: 6, kind: input, shape index: {}]
  %s7 = inlined_call_operand.vmem [shape: f32[1,128], index: 7, kind: input, shape index: {}]
  %s8 = inlined_call_operand.hbm [shape: f32[16,128], index: 8, kind: output, shape index: {}]
  %s9 = sld [smem:[#allocation0]]
  $region62: #{tpu_custom_call.1} parent=0
    _
  %s11 = ssub.s32 1, %s9
  %s12 = scalar_select 0, %s11, %s9
  $region1: #{tpu_custom_call.1} parent=0
    #allocation2 [shape = 'u8[131072]{0}', space=vmem, size = 0x20000, scoped, tag = 'input window, operand 0, single buffered']
    #allocation3 [shape = 's32[1]{0}', space=sflag, size = 0x4, scoped, tag = 'scoped memory for tpu_custom_call.1']
    #allocation4 [shape = 's32[1]{0}', space=sflag, size = 0x4, scoped, tag = 'scoped memory for tpu_custom_call.1']
    #allocation5 [shape = 'u8[524288]{0}', space=vmem, size = 0x80000, scoped, tag = 'input window, operand 1, single buffered']
    #allocation6 [shape = 's32[1]{0}', space=sflag, size = 0x4, scoped, tag = 'scoped memory for tpu_custom_call.1']
    #allocation7 [shape = 'u8[1024]{0}', space=vmem, size = 0x400, scoped, tag = 'input window, operand 2, single buffered']
    #allocation8 [shape = 'u8[65536]{0}', space=vmem, size = 0x10000, scoped, tag = 'input window, operand 4, single buffered']
    #allocation9 [shape = 's32[1]{0}', space=sflag, size = 0x4, scoped, tag = 'scoped memory for tpu_custom_call.1']
    #allocation10 [shape = 'u8[32768]{0}', space=vmem, size = 0x8000, scoped, tag = 'input window, operand 6, single buffered']
    #allocation11 [shape = 'u8[8192]{0}', space=vmem, size = 0x2000, scoped, tag = 'output window, operand 0, single buffered']
    %13 = vsyncpa [#allocation3], 0
    %14 = vsyncpa [#allocation6], 0
    %15 = vsyncpa [#allocation9], 0
    %16 = vsyncpa [#allocation4], 0
    // Predicated region
    $region2: #{tpu_custom_call.1} parent=1 // pred_check
      _
    $region3: #{tpu_custom_call.1} parent=1 // pred_check_branch
      %18 = sbr.rel (0) target = $region5
    $region4: #{tpu_custom_call.1} parent=1 // pred_region
      %20 = vsyncadd [#allocation3], 0
      %s21 = sshll.u32 %s0, 4
      %s22 = int_to_ptr.hbm [resolvable:$true] %s21
      %s23 = sshll.u32 [#allocation2], 4
      %s24 = int_to_ptr.vmem [resolvable:$true] %s23
      %29 = dma.hbm_to_vmem [thread:$0]  %s22, 4096, %s24, [#allocation3], 2048, 2048, 128
    $region5: #{tpu_custom_call.1} parent=1 // pred_fallthru
      _
    // Predicated region
    $region6: #{tpu_custom_call.1} parent=1 // pred_check
      _
    $region7: #{tpu_custom_call.1} parent=1 // pred_check_branch
      %31 = sbr.rel (0) target = $region9
    $region8: #{tpu_custom_call.1} parent=1 // pred_region
      %33 = vsyncadd [#allocation6], 0
      %s34 = sshll.u32 %s1, 4
      %s35 = int_to_ptr.hbm [resolvable:$true] %s34
      %s36 = sshll.u32 [#allocation5], 4
      %s37 = int_to_ptr.vmem [resolvable:$true] %s36
      %42 = dma.hbm_to_vmem [thread:$0]  %s35, 16384, %s37, [#allocation6], 256, 256, 16
    $region9: #{tpu_custom_call.1} parent=1 // pred_fallthru
      _
    // Predicated region
    $region10: #{tpu_custom_call.1} parent=1 // pred_check
      _
    $region11: #{tpu_custom_call.1} parent=1 // pred_check_branch
      %44 = sbr.rel (0) target = $region13
    $region12: #{tpu_custom_call.1} parent=1 // pred_region
      %46 = vsyncadd [#allocation6], 0
      %s48 = sshll.u32 %s2, 4
      %s49 = int_to_ptr.hbm [resolvable:$true] %s48
      %s50 = sshll.u32 [#allocation7], 4
      %s51 = int_to_ptr.vmem [resolvable:$true] %s50
      %53 = dma.hbm_to_vmem [thread:$0]  %s49, 32, %s51, [#allocation6]
    $region13: #{tpu_custom_call.1} parent=1 // pred_fallthru
      _
    // Predicated region
    $region14: #{tpu_custom_call.1} parent=1 // pred_check
      _
    $region15: #{tpu_custom_call.1} parent=1 // pred_check_branch
      %55 = sbr.rel (0) target = $region17
    $region16: #{tpu_custom_call.1} parent=1 // pred_region
      _
    $region17: #{tpu_custom_call.1} parent=1 // pred_fallthru
      _
    // Predicated region
    $region18: #{tpu_custom_call.1} parent=1 // pred_check
      _
    $region19: #{tpu_custom_call.1} parent=1 // pred_check_branch
      %57 = sbr.rel (0) target = $region21
    $region20: #{tpu_custom_call.1} parent=1 // pred_region
      %59 = vsyncadd [#allocation9], 0
      %s60 = sshll.u32 %s4, 4
      %s61 = int_to_ptr.hbm [resolvable:$true] %s60
      %s62 = sshll.u32 [#allocation8], 4
      %s63 = int_to_ptr.vmem [resolvable:$true] %s62
      %68 = dma.hbm_to_vmem [thread:$0]  %s61, 2048, %s63, [#allocation9], 64, 64, 4
    $region21: #{tpu_custom_call.1} parent=1 // pred_fallthru
      _
    // Predicated region
    $region22: #{tpu_custom_call.1} parent=1 // pred_check
      _
    $region23: #{tpu_custom_call.1} parent=1 // pred_check_branch
      %70 = sbr.rel (0) target = $region25
    $region24: #{tpu_custom_call.1} parent=1 // pred_region
      _
    $region25: #{tpu_custom_call.1} parent=1 // pred_fallthru
      _
    // Predicated region
    $region26: #{tpu_custom_call.1} parent=1 // pred_check
      _
    $region27: #{tpu_custom_call.1} parent=1 // pred_check_branch
      %72 = sbr.rel (0) target = $region29
    $region28: #{tpu_custom_call.1} parent=1 // pred_region
      %74 = vsyncadd [#allocation9], 0
      %s75 = sshll.u32 %s6, 4
      %s76 = int_to_ptr.hbm [resolvable:$true] %s75
      %s77 = sshll.u32 [#allocation10], 4
      %s78 = int_to_ptr.vmem [resolvable:$true] %s77
      %83 = dma.hbm_to_vmem [thread:$0]  %s76, 1024, %s78, [#allocation9], 64, 64, 4
    $region29: #{tpu_custom_call.1} parent=1 // pred_fallthru
      _
    // Predicated region
    $region30: #{tpu_custom_call.1} parent=1 // pred_check
      _
    $region31: #{tpu_custom_call.1} parent=1 // pred_check_branch
      %85 = sbr.rel (0) target = $region33
    $region32: #{tpu_custom_call.1} parent=1 // pred_region
      _
    $region33: #{tpu_custom_call.1} parent=1 // pred_fallthru
      _
    // Predicated region
    $region34: #{tpu_custom_call.1} parent=1 // pred_check
      _
    $region35: #{tpu_custom_call.1} parent=1 // pred_check_branch
      %87 = sbr.rel (0) target = $region37
    $region36: #{tpu_custom_call.1} parent=1 // pred_region
      %89 = dma.done [#allocation3], 4096
    $region37: #{tpu_custom_call.1} parent=1 // pred_fallthru
      _
    // Predicated region
    $region38: #{tpu_custom_call.1} parent=1 // pred_check
      _
    $region39: #{tpu_custom_call.1} parent=1 // pred_check_branch
      %91 = sbr.rel (0) target = $region41
    $region40: #{tpu_custom_call.1} parent=1 // pred_region
      %93 = dma.done [#allocation6], 16384
    $region41: #{tpu_custom_call.1} parent=1 // pred_fallthru
      _
    // Predicated region
    $region42: #{tpu_custom_call.1} parent=1 // pred_check
      _
    $region43: #{tpu_custom_call.1} parent=1 // pred_check_branch
      %95 = sbr.rel (0) target = $region45
    $region44: #{tpu_custom_call.1} parent=1 // pred_region
      %97 = dma.done [#allocation6], 32
    $region45: #{tpu_custom_call.1} parent=1 // pred_fallthru
      _
    // Predicated region
    $region46: #{tpu_custom_call.1} parent=1 // pred_check
      _
    $region47: #{tpu_custom_call.1} parent=1 // pred_check_branch
      %99 = sbr.rel (0) target = $region49
    $region48: #{tpu_custom_call.1} parent=1 // pred_region
      %101 = dma.done [#allocation9], 2048
    $region49: #{tpu_custom_call.1} parent=1 // pred_fallthru
      _
    // Predicated region
    $region50: #{tpu_custom_call.1} parent=1 // pred_check
      _
    $region51: #{tpu_custom_call.1} parent=1 // pred_check_branch
      %103 = sbr.rel (0) target = $region53
    $region52: #{tpu_custom_call.1} parent=1 // pred_region
      %105 = dma.done [#allocation9], 1024
    $region53: #{tpu_custom_call.1} parent=1 // pred_fallthru
      _
    %v106 = vld [vmem:[#allocation2] sm:$0xff]
    %v107 = vld [vmem:[#allocation2 + $0x8] sm:$0xff]
    %v108 = vld [vmem:[#allocation2 + $0x10] sm:$0xff]
    %v109 = vld [vmem:[#allocation2 + $0x18] sm:$0xff]
    %v110 = vld [vmem:[#allocation2 + $0x20] sm:$0xff]
    %v111 = vld [vmem:[#allocation2 + $0x28] sm:$0xff]
    %v112 = vld [vmem:[#allocation2 + $0x30] sm:$0xff]
    %v113 = vld [vmem:[#allocation2 + $0x38] sm:$0xff]
    %v114 = vld [vmem:[#allocation2 + $0x40] sm:$0xff]
    %v115 = vld [vmem:[#allocation2 + $0x48] sm:$0xff]
    %v116 = vld [vmem:[#allocation2 + $0x50] sm:$0xff]
    %v117 = vld [vmem:[#allocation2 + $0x58] sm:$0xff]
    %v118 = vld [vmem:[#allocation2 + $0x60] sm:$0xff]
    %v119 = vld [vmem:[#allocation2 + $0x68] sm:$0xff]
    %v120 = vld [vmem:[#allocation2 + $0x70] sm:$0xff]
    %v121 = vld [vmem:[#allocation2 + $0x78] sm:$0xff]
    %v122 = vld [vmem:[#allocation2 + $0x80] sm:$0xff]
    %v123 = vld [vmem:[#allocation2 + $0x88] sm:$0xff]
    %v124 = vld [vmem:[#allocation2 + $0x90] sm:$0xff]
    %v125 = vld [vmem:[#allocation2 + $0x98] sm:$0xff]
    %v126 = vld [vmem:[#allocation2 + $0xa0] sm:$0xff]
    %v127 = vld [vmem:[#allocation2 + $0xa8] sm:$0xff]
    %v128 = vld [vmem:[#allocation2 + $0xb0] sm:$0xff]
    %v129 = vld [vmem:[#allocation2 + $0xb8] sm:$0xff]
    %v130 = vld [vmem:[#allocation2 + $0xc0] sm:$0xff]
    %v131 = vld [vmem:[#allocation2 + $0xc8] sm:$0xff]
    %v132 = vld [vmem:[#allocation2 + $0xd0] sm:$0xff]
    %v133 = vld [vmem:[#allocation2 + $0xd8] sm:$0xff]
    %v134 = vld [vmem:[#allocation2 + $0xe0] sm:$0xff]
    %v135 = vld [vmem:[#allocation2 + $0xe8] sm:$0xff]
    %v136 = vld [vmem:[#allocation2 + $0xf0] sm:$0xff]
    %v137 = vld [vmem:[#allocation2 + $0xf8] sm:$0xff]
    %v138 = vpack.c.bf16 %v122, %v106
    %v139 = vpack.c.bf16 %v123, %v107
    %v140 = vpack.c.bf16 %v124, %v108
    %v141 = vpack.c.bf16 %v125, %v109
    %v142 = vpack.c.bf16 %v126, %v110
    %v143 = vpack.c.bf16 %v127, %v111
    %v144 = vpack.c.bf16 %v128, %v112
    %v145 = vpack.c.bf16 %v129, %v113
    %v146 = vpack.c.bf16 %v130, %v114
    %v147 = vpack.c.bf16 %v131, %v115
    %v148 = vpack.c.bf16 %v132, %v116
    %v149 = vpack.c.bf16 %v133, %v117
    %v150 = vpack.c.bf16 %v134, %v118
    %v151 = vpack.c.bf16 %v135, %v119
    %v152 = vpack.c.bf16 %v136, %v120
    %v153 = vpack.c.bf16 %v137, %v121
    %v154 = vld [vmem:[#allocation5] sm:$0xff]
    %v155 = vld [vmem:[#allocation5 + $0x8] sm:$0xff]
    %v156 = vld [vmem:[#allocation5 + $0x10] sm:$0xff]
    %v157 = vld [vmem:[#allocation5 + $0x18] sm:$0xff]
    %v158 = vld [vmem:[#allocation5 + $0x20] sm:$0xff]
    %v159 = vld [vmem:[#allocation5 + $0x28] sm:$0xff]
    %v160 = vld [vmem:[#allocation5 + $0x30] sm:$0xff]
    %v161 = vld [vmem:[#allocation5 + $0x38] sm:$0xff]
    %v162 = vld [vmem:[#allocation5 + $0x40] sm:$0xff]
    %v163 = vld [vmem:[#allocation5 + $0x48] sm:$0xff]
    %v164 = vld [vmem:[#allocation5 + $0x50] sm:$0xff]
    %v165 = vld [vmem:[#allocation5 + $0x58] sm:$0xff]
    %v166 = vld [vmem:[#allocation5 + $0x60] sm:$0xff]
    %v167 = vld [vmem:[#allocation5 + $0x68] sm:$0xff]
    %v168 = vld [vmem:[#allocation5 + $0x70] sm:$0xff]
    %v169 = vld [vmem:[#allocation5 + $0x78] sm:$0xff]
    %v170 = vld [vmem:[#allocation5 + $0x80] sm:$0xff]
    %v171 = vld [vmem:[#allocation5 + $0x88] sm:$0xff]
    %v172 = vld [vmem:[#allocation5 + $0x90] sm:$0xff]
    %v173 = vld [vmem:[#allocation5 + $0x98] sm:$0xff]
    %v174 = vld [vmem:[#allocation5 + $0xa0] sm:$0xff]
    %v175 = vld [vmem:[#allocation5 + $0xa8] sm:$0xff]
    %v176 = vld [vmem:[#allocation5 + $0xb0] sm:$0xff]
    %v177 = vld [vmem:[#allocation5 + $0xb8] sm:$0xff]
    %v178 = vld [vmem:[#allocation5 + $0xc0] sm:$0xff]
    %v179 = vld [vmem:[#allocation5 + $0xc8] sm:$0xff]
    %v180 = vld [vmem:[#allocation5 + $0xd0] sm:$0xff]
    %v181 = vld [vmem:[#allocation5 + $0xd8] sm:$0xff]
    %v182 = vld [vmem:[#allocation5 + $0xe0] sm:$0xff]
    %v183 = vld [vmem:[#allocation5 + $0xe8] sm:$0xff]
    %v184 = vld [vmem:[#allocation5 + $0xf0] sm:$0xff]
    %v185 = vld [vmem:[#allocation5 + $0xf8] sm:$0xff]
    %v186 = vld [vmem:[#allocation5 + $0x100] sm:$0xff]
    %v187 = vld [vmem:[#allocation5 + $0x108] sm:$0xff]
    %v188 = vld [vmem:[#allocation5 + $0x110] sm:$0xff]
    %v189 = vld [vmem:[#allocation5 + $0x118] sm:$0xff]
    %v190 = vld [vmem:[#allocation5 + $0x120] sm:$0xff]
    %v191 = vld [vmem:[#allocation5 + $0x128] sm:$0xff]
    %v192 = vld [vmem:[#allocation5 + $0x130] sm:$0xff]
    %v193 = vld [vmem:[#allocation5 + $0x138] sm:$0xff]
    %v194 = vld [vmem:[#allocation5 + $0x140] sm:$0xff]
    %v195 = vld [vmem:[#allocation5 + $0x148] sm:$0xff]
    %v196 = vld [vmem:[#allocation5 + $0x150] sm:$0xff]
    %v197 = vld [vmem:[#allocation5 + $0x158] sm:$0xff]
    %v198 = vld [vmem:[#allocation5 + $0x160] sm:$0xff]
    %v199 = vld [vmem:[#allocation5 + $0x168] sm:$0xff]
    %v200 = vld [vmem:[#allocation5 + $0x170] sm:$0xff]
    %v201 = vld [vmem:[#allocation5 + $0x178] sm:$0xff]
    %v202 = vld [vmem:[#allocation5 + $0x180] sm:$0xff]
    %v203 = vld [vmem:[#allocation5 + $0x188] sm:$0xff]
    %v204 = vld [vmem:[#allocation5 + $0x190] sm:$0xff]
    %v205 = vld [vmem:[#allocation5 + $0x198] sm:$0xff]
    %v206 = vld [vmem:[#allocation5 + $0x1a0] sm:$0xff]
    %v207 = vld [vmem:[#allocation5 + $0x1a8] sm:$0xff]
    %v208 = vld [vmem:[#allocation5 + $0x1b0] sm:$0xff]
    %v209 = vld [vmem:[#allocation5 + $0x1b8] sm:$0xff]
    %v210 = vld [vmem:[#allocation5 + $0x1c0] sm:$0xff]
    %v211 = vld [vmem:[#allocation5 + $0x1c8] sm:$0xff]
    %v212 = vld [vmem:[#allocation5 + $0x1d0] sm:$0xff]
    %v213 = vld [vmem:[#allocation5 + $0x1d8] sm:$0xff]
    %v214 = vld [vmem:[#allocation5 + $0x1e0] sm:$0xff]
    %v215 = vld [vmem:[#allocation5 + $0x1e8] sm:$0xff]
    %v216 = vld [vmem:[#allocation5 + $0x1f0] sm:$0xff]
    %v217 = vld [vmem:[#allocation5 + $0x1f8] sm:$0xff]
    %v218 = vld [vmem:[#allocation5 + $0x200] sm:$0xff]
    %v219 = vld [vmem:[#allocation5 + $0x208] sm:$0xff]
    %v220 = vld [vmem:[#allocation5 + $0x210] sm:$0xff]
    %v221 = vld [vmem:[#allocation5 + $0x218] sm:$0xff]
    %v222 = vld [vmem:[#allocation5 + $0x220] sm:$0xff]
    %v223 = vld [vmem:[#allocation5 + $0x228] sm:$0xff]
    %v224 = vld [vmem:[#allocation5 + $0x230] sm:$0xff]
    %v225 = vld [vmem:[#allocation5 + $0x238] sm:$0xff]
    %v226 = vld [vmem:[#allocation5 + $0x240] sm:$0xff]
    %v227 = vld [vmem:[#allocation5 + $0x248] sm:$0xff]
    %v228 = vld [vmem:[#allocation5 + $0x250] sm:$0xff]
    %v229 = vld [vmem:[#allocation5 + $0x258] sm:$0xff]
    %v230 = vld [vmem:[#allocation5 + $0x260] sm:$0xff]
    %v231 = vld [vmem:[#allocation5 + $0x268] sm:$0xff]
    %v232 = vld [vmem:[#allocation5 + $0x270] sm:$0xff]
    %v233 = vld [vmem:[#allocation5 + $0x278] sm:$0xff]
    %v234 = vld [vmem:[#allocation5 + $0x280] sm:$0xff]
    %v235 = vld [vmem:[#allocation5 + $0x288] sm:$0xff]
    %v236 = vld [vmem:[#allocation5 + $0x290] sm:$0xff]
    %v237 = vld [vmem:[#allocation5 + $0x298] sm:$0xff]
    %v238 = vld [vmem:[#allocation5 + $0x2a0] sm:$0xff]
    %v239 = vld [vmem:[#allocation5 + $0x2a8] sm:$0xff]
    %v240 = vld [vmem:[#allocation5 + $0x2b0] sm:$0xff]
    %v241 = vld [vmem:[#allocation5 + $0x2b8] sm:$0xff]
    %v242 = vld [vmem:[#allocation5 + $0x2c0] sm:$0xff]
    %v243 = vld [vmem:[#allocation5 + $0x2c8] sm:$0xff]
    %v244 = vld [vmem:[#allocation5 + $0x2d0] sm:$0xff]
    %v245 = vld [vmem:[#allocation5 + $0x2d8] sm:$0xff]
    %v246 = vld [vmem:[#allocation5 + $0x2e0] sm:$0xff]
    %v247 = vld [vmem:[#allocation5 + $0x2e8] sm:$0xff]
    %v248 = vld [vmem:[#allocation5 + $0x2f0] sm:$0xff]
    %v249 = vld [vmem:[#allocation5 + $0x2f8] sm:$0xff]
    %v250 = vld [vmem:[#allocation5 + $0x300] sm:$0xff]
    %v251 = vld [vmem:[#allocation5 + $0x308] sm:$0xff]
    %v252 = vld [vmem:[#allocation5 + $0x310] sm:$0xff]
    %v253 = vld [vmem:[#allocation5 + $0x318] sm:$0xff]
    %v254 = vld [vmem:[#allocation5 + $0x320] sm:$0xff]
    %v255 = vld [vmem:[#allocation5 + $0x328] sm:$0xff]
    %v256 = vld [vmem:[#allocation5 + $0x330] sm:$0xff]
    %v257 = vld [vmem:[#allocation5 + $0x338] sm:$0xff]
    %v258 = vld [vmem:[#allocation5 + $0x340] sm:$0xff]
    %v259 = vld [vmem:[#allocation5 + $0x348] sm:$0xff]
    %v260 = vld [vmem:[#allocation5 + $0x350] sm:$0xff]
    %v261 = vld [vmem:[#allocation5 + $0x358] sm:$0xff]
    %v262 = vld [vmem:[#allocation5 + $0x360] sm:$0xff]
    %v263 = vld [vmem:[#allocation5 + $0x368] sm:$0xff]
    %v264 = vld [vmem:[#allocation5 + $0x370] sm:$0xff]
    %v265 = vld [vmem:[#allocation5 + $0x378] sm:$0xff]
    %v266 = vld [vmem:[#allocation5 + $0x380] sm:$0xff]
    %v267 = vld [vmem:[#allocation5 + $0x388] sm:$0xff]
    %v268 = vld [vmem:[#allocation5 + $0x390] sm:$0xff]
    %v269 = vld [vmem:[#allocation5 + $0x398] sm:$0xff]
    %v270 = vld [vmem:[#allocation5 + $0x3a0] sm:$0xff]
    %v271 = vld [vmem:[#allocation5 + $0x3a8] sm:$0xff]
    %v272 = vld [vmem:[#allocation5 + $0x3b0] sm:$0xff]
    %v273 = vld [vmem:[#allocation5 + $0x3b8] sm:$0xff]
    %v274 = vld [vmem:[#allocation5 + $0x3c0] sm:$0xff]
    %v275 = vld [vmem:[#allocation5 + $0x3c8] sm:$0xff]
    %v276 = vld [vmem:[#allocation5 + $0x3d0] sm:$0xff]
    %v277 = vld [vmem:[#allocation5 + $0x3d8] sm:$0xff]
    %v278 = vld [vmem:[#allocation5 + $0x3e0] sm:$0xff]
    %v279 = vld [vmem:[#allocation5 + $0x3e8] sm:$0xff]
    %v280 = vld [vmem:[#allocation5 + $0x3f0] sm:$0xff]
    %v281 = vld [vmem:[#allocation5 + $0x3f8] sm:$0xff]
    %v282 = vunpack.c.0.s8 %v154
    %v283 = vunpack.c.0.s8 %v155
    %v284 = vunpack.c.1.s8 %v154
    %v285 = vunpack.c.1.s8 %v155
    %v286 = vunpack.c.2.s8 %v154
    %v287 = vunpack.c.2.s8 %v155
    %v288 = vunpack.c.3.s8 %v154
    %v289 = vunpack.c.3.s8 %v155
    %v290 = vunpack.c.0.s8 %v156
    %v291 = vunpack.c.0.s8 %v157
    %v292 = vunpack.c.1.s8 %v156
    %v293 = vunpack.c.1.s8 %v157
    %v294 = vunpack.c.2.s8 %v156
    %v295 = vunpack.c.2.s8 %v157
    %v296 = vunpack.c.3.s8 %v156
    %v297 = vunpack.c.3.s8 %v157
    %v298 = vunpack.c.0.s8 %v158
    %v299 = vunpack.c.0.s8 %v159
    %v300 = vunpack.c.1.s8 %v158
    %v301 = vunpack.c.1.s8 %v159
    %v302 = vunpack.c.2.s8 %v158
    %v303 = vunpack.c.2.s8 %v159
    %v304 = vunpack.c.3.s8 %v158
    %v305 = vunpack.c.3.s8 %v159
    %v306 = vunpack.c.0.s8 %v160
    %v307 = vunpack.c.0.s8 %v161
    %v308 = vunpack.c.1.s8 %v160
    %v309 = vunpack.c.1.s8 %v161
    %v310 = vunpack.c.2.s8 %v160
    %v311 = vunpack.c.2.s8 %v161
    %v312 = vunpack.c.3.s8 %v160
    %v313 = vunpack.c.3.s8 %v161
    %v314 = vunpack.c.0.s8 %v162
    %v315 = vunpack.c.0.s8 %v163
    %v316 = vunpack.c.1.s8 %v162
    %v317 = vunpack.c.1.s8 %v163
    %v318 = vunpack.c.2.s8 %v162
    %v319 = vunpack.c.2.s8 %v163
    %v320 = vunpack.c.3.s8 %v162
    %v321 = vunpack.c.3.s8 %v163
    %v322 = vunpack.c.0.s8 %v164
    %v323 = vunpack.c.0.s8 %v165
    %v324 = vunpack.c.1.s8 %v164
    %v325 = vunpack.c.1.s8 %v165
    %v326 = vunpack.c.2.s8 %v164
    %v327 = vunpack.c.2.s8 %v165
    %v328 = vunpack.c.3.s8 %v164
    %v329 = vunpack.c.3.s8 %v165
    %v330 = vunpack.c.0.s8 %v166
    %v331 = vunpack.c.0.s8 %v167
    %v332 = vunpack.c.1.s8 %v166
    %v333 = vunpack.c.1.s8 %v167
    %v334 = vunpack.c.2.s8 %v166
    %v335 = vunpack.c.2.s8 %v167
    %v336 = vunpack.c.3.s8 %v166
    %v337 = vunpack.c.3.s8 %v167
    %v338 = vunpack.c.0.s8 %v168
    %v339 = vunpack.c.0.s8 %v169
    %v340 = vunpack.c.1.s8 %v168
    %v341 = vunpack.c.1.s8 %v169
    %v342 = vunpack.c.2.s8 %v168
    %v343 = vunpack.c.2.s8 %v169
    %v344 = vunpack.c.3.s8 %v168
    %v345 = vunpack.c.3.s8 %v169
    %v346 = vunpack.c.0.s8 %v170
    %v347 = vunpack.c.0.s8 %v171
    %v348 = vunpack.c.1.s8 %v170
    %v349 = vunpack.c.1.s8 %v171
    %v350 = vunpack.c.2.s8 %v170
    %v351 = vunpack.c.2.s8 %v171
    %v352 = vunpack.c.3.s8 %v170
    %v353 = vunpack.c.3.s8 %v171
    %v354 = vunpack.c.0.s8 %v172
    %v355 = vunpack.c.0.s8 %v173
    %v356 = vunpack.c.1.s8 %v172
    %v357 = vunpack.c.1.s8 %v173
    %v358 = vunpack.c.2.s8 %v172
    %v359 = vunpack.c.2.s8 %v173
    %v360 = vunpack.c.3.s8 %v172
    %v361 = vunpack.c.3.s8 %v173
    %v362 = vunpack.c.0.s8 %v174
    %v363 = vunpack.c.0.s8 %v175
    %v364 = vunpack.c.1.s8 %v174
    %v365 = vunpack.c.1.s8 %v175
    %v366 = vunpack.c.2.s8 %v174
    %v367 = vunpack.c.2.s8 %v175
    %v368 = vunpack.c.3.s8 %v174
    %v369 = vunpack.c.3.s8 %v175
    %v370 = vunpack.c.0.s8 %v176
    %v371 = vunpack.c.0.s8 %v177
    %v372 = vunpack.c.1.s8 %v176
    %v373 = vunpack.c.1.s8 %v177
    %v374 = vunpack.c.2.s8 %v176
    %v375 = vunpack.c.2.s8 %v177
    %v376 = vunpack.c.3.s8 %v176
    %v377 = vunpack.c.3.s8 %v177
    %v378 = vunpack.c.0.s8 %v178
    %v379 = vunpack.c.0.s8 %v179
    %v380 = vunpack.c.1.s8 %v178
    %v381 = vunpack.c.1.s8 %v179
    %v382 = vunpack.c.2.s8 %v178
    %v383 = vunpack.c.2.s8 %v179
    %v384 = vunpack.c.3.s8 %v178
    %v385 = vunpack.c.3.s8 %v179
    %v386 = vunpack.c.0.s8 %v180
    %v387 = vunpack.c.0.s8 %v181
    %v388 = vunpack.c.1.s8 %v180
    %v389 = vunpack.c.1.s8 %v181
    %v390 = vunpack.c.2.s8 %v180
    %v391 = vunpack.c.2.s8 %v181
    %v392 = vunpack.c.3.s8 %v180
    %v393 = vunpack.c.3.s8 %v181
    %v394 = vunpack.c.0.s8 %v182
    %v395 = vunpack.c.0.s8 %v183
    %v396 = vunpack.c.1.s8 %v182
    %v397 = vunpack.c.1.s8 %v183
    %v398 = vunpack.c.2.s8 %v182
    %v399 = vunpack.c.2.s8 %v183
    %v400 = vunpack.c.3.s8 %v182
    %v401 = vunpack.c.3.s8 %v183
    %v402 = vunpack.c.0.s8 %v184
    %v403 = vunpack.c.0.s8 %v185
    %v404 = vunpack.c.1.s8 %v184
    %v405 = vunpack.c.1.s8 %v185
    %v406 = vunpack.c.2.s8 %v184
    %v407 = vunpack.c.2.s8 %v185
    %v408 = vunpack.c.3.s8 %v184
    %v409 = vunpack.c.3.s8 %v185
    %v410 = vunpack.c.0.s8 %v186
    %v411 = vunpack.c.0.s8 %v187
    %v412 = vunpack.c.1.s8 %v186
    %v413 = vunpack.c.1.s8 %v187
    %v414 = vunpack.c.2.s8 %v186
    %v415 = vunpack.c.2.s8 %v187
    %v416 = vunpack.c.3.s8 %v186
    %v417 = vunpack.c.3.s8 %v187
    %v418 = vunpack.c.0.s8 %v188
    %v419 = vunpack.c.0.s8 %v189
    %v420 = vunpack.c.1.s8 %v188
    %v421 = vunpack.c.1.s8 %v189
    %v422 = vunpack.c.2.s8 %v188
    %v423 = vunpack.c.2.s8 %v189
    %v424 = vunpack.c.3.s8 %v188
    %v425 = vunpack.c.3.s8 %v189
    %v426 = vunpack.c.0.s8 %v190
    %v427 = vunpack.c.0.s8 %v191
    %v428 = vunpack.c.1.s8 %v190
    %v429 = vunpack.c.1.s8 %v191
    %v430 = vunpack.c.2.s8 %v190
    %v431 = vunpack.c.2.s8 %v191
    %v432 = vunpack.c.3.s8 %v190
    %v433 = vunpack.c.3.s8 %v191
    %v434 = vunpack.c.0.s8 %v192
    %v435 = vunpack.c.0.s8 %v193
    %v436 = vunpack.c.1.s8 %v192
    %v437 = vunpack.c.1.s8 %v193
    %v438 = vunpack.c.2.s8 %v192
    %v439 = vunpack.c.2.s8 %v193
    %v440 = vunpack.c.3.s8 %v192
    %v441 = vunpack.c.3.s8 %v193
    %v442 = vunpack.c.0.s8 %v194
    %v443 = vunpack.c.0.s8 %v195
    %v444 = vunpack.c.1.s8 %v194
    %v445 = vunpack.c.1.s8 %v195
    %v446 = vunpack.c.2.s8 %v194
    %v447 = vunpack.c.2.s8 %v195
    %v448 = vunpack.c.3.s8 %v194
    %v449 = vunpack.c.3.s8 %v195
    %v450 = vunpack.c.0.s8 %v196
    %v451 = vunpack.c.0.s8 %v197
    %v452 = vunpack.c.1.s8 %v196
    %v453 = vunpack.c.1.s8 %v197
    %v454 = vunpack.c.2.s8 %v196
    %v455 = vunpack.c.2.s8 %v197
    %v456 = vunpack.c.3.s8 %v196
    %v457 = vunpack.c.3.s8 %v197
    %v458 = vunpack.c.0.s8 %v198
    %v459 = vunpack.c.0.s8 %v199
    %v460 = vunpack.c.1.s8 %v198
    %v461 = vunpack.c.1.s8 %v199
    %v462 = vunpack.c.2.s8 %v198
    %v463 = vunpack.c.2.s8 %v199
    %v464 = vunpack.c.3.s8 %v198
    %v465 = vunpack.c.3.s8 %v199
    %v466 = vunpack.c.0.s8 %v200
    %v467 = vunpack.c.0.s8 %v201
    %v468 = vunpack.c.1.s8 %v200
    %v469 = vunpack.c.1.s8 %v201
    %v470 = vunpack.c.2.s8 %v200
    %v471 = vunpack.c.2.s8 %v201
    %v472 = vunpack.c.3.s8 %v200
    %v473 = vunpack.c.3.s8 %v201
    %v474 = vunpack.c.0.s8 %v202
    %v475 = vunpack.c.0.s8 %v203
    %v476 = vunpack.c.1.s8 %v202
    %v477 = vunpack.c.1.s8 %v203
    %v478 = vunpack.c.2.s8 %v202
    %v479 = vunpack.c.2.s8 %v203
    %v480 = vunpack.c.3.s8 %v202
    %v481 = vunpack.c.3.s8 %v203
    %v482 = vunpack.c.0.s8 %v204
    %v483 = vunpack.c.0.s8 %v205
    %v484 = vunpack.c.1.s8 %v204
    %v485 = vunpack.c.1.s8 %v205
    %v486 = vunpack.c.2.s8 %v204
    %v487 = vunpack.c.2.s8 %v205
    %v488 = vunpack.c.3.s8 %v204
    %v489 = vunpack.c.3.s8 %v205
    %v490 = vunpack.c.0.s8 %v206
    %v491 = vunpack.c.0.s8 %v207
    %v492 = vunpack.c.1.s8 %v206
    %v493 = vunpack.c.1.s8 %v207
    %v494 = vunpack.c.2.s8 %v206
    %v495 = vunpack.c.2.s8 %v207
    %v496 = vunpack.c.3.s8 %v206
    %v497 = vunpack.c.3.s8 %v207
    %v498 = vunpack.c.0.s8 %v208
    %v499 = vunpack.c.0.s8 %v209
    %v500 = vunpack.c.1.s8 %v208
    %v501 = vunpack.c.1.s8 %v209
    %v502 = vunpack.c.2.s8 %v208
    %v503 = vunpack.c.2.s8 %v209
    %v504 = vunpack.c.3.s8 %v208
    %v505 = vunpack.c.3.s8 %v209
    %v506 = vunpack.c.0.s8 %v210
    %v507 = vunpack.c.0.s8 %v211
    %v508 = vunpack.c.1.s8 %v210
    %v509 = vunpack.c.1.s8 %v211
    %v510 = vunpack.c.2.s8 %v210
    %v511 = vunpack.c.2.s8 %v211
    %v512 = vunpack.c.3.s8 %v210
    %v513 = vunpack.c.3.s8 %v211
    %v514 = vunpack.c.0.s8 %v212
    %v515 = vunpack.c.0.s8 %v213
    %v516 = vunpack.c.1.s8 %v212
    %v517 = vunpack.c.1.s8 %v213
    %v518 = vunpack.c.2.s8 %v212
    %v519 = vunpack.c.2.s8 %v213
    %v520 = vunpack.c.3.s8 %v212
    %v521 = vunpack.c.3.s8 %v213
    %v522 = vunpack.c.0.s8 %v214
    %v523 = vunpack.c.0.s8 %v215
    %v524 = vunpack.c.1.s8 %v214
    %v525 = vunpack.c.1.s8 %v215
    %v526 = vunpack.c.2.s8 %v214
    %v527 = vunpack.c.2.s8 %v215
    %v528 = vunpack.c.3.s8 %v214
    %v529 = vunpack.c.3.s8 %v215
    %v530 = vunpack.c.0.s8 %v216
    %v531 = vunpack.c.0.s8 %v217
    %v532 = vunpack.c.1.s8 %v216
    %v533 = vunpack.c.1.s8 %v217
    %v534 = vunpack.c.2.s8 %v216
    %v535 = vunpack.c.2.s8 %v217
    %v536 = vunpack.c.3.s8 %v216
    %v537 = vunpack.c.3.s8 %v217
    %v538 = vunpack.c.0.s8 %v218
    %v539 = vunpack.c.0.s8 %v219
    %v540 = vunpack.c.1.s8 %v218
    %v541 = vunpack.c.1.s8 %v219
    %v542 = vunpack.c.2.s8 %v218
    %v543 = vunpack.c.2.s8 %v219
    %v544 = vunpack.c.3.s8 %v218
    %v545 = vunpack.c.3.s8 %v219
    %v546 = vunpack.c.0.s8 %v220
    %v547 = vunpack.c.0.s8 %v221
    %v548 = vunpack.c.1.s8 %v220
    %v549 = vunpack.c.1.s8 %v221
    %v550 = vunpack.c.2.s8 %v220
    %v551 = vunpack.c.2.s8 %v221
    %v552 = vunpack.c.3.s8 %v220
    %v553 = vunpack.c.3.s8 %v221
    %v554 = vunpack.c.0.s8 %v222
    %v555 = vunpack.c.0.s8 %v223
    %v556 = vunpack.c.1.s8 %v222
    %v557 = vunpack.c.1.s8 %v223
    %v558 = vunpack.c.2.s8 %v222
    %v559 = vunpack.c.2.s8 %v223
    %v560 = vunpack.c.3.s8 %v222
    %v561 = vunpack.c.3.s8 %v223
    %v562 = vunpack.c.0.s8 %v224
    %v563 = vunpack.c.0.s8 %v225
    %v564 = vunpack.c.1.s8 %v224
    %v565 = vunpack.c.1.s8 %v225
    %v566 = vunpack.c.2.s8 %v224
    %v567 = vunpack.c.2.s8 %v225
    %v568 = vunpack.c.3.s8 %v224
    %v569 = vunpack.c.3.s8 %v225
    %v570 = vunpack.c.0.s8 %v226
    %v571 = vunpack.c.0.s8 %v227
    %v572 = vunpack.c.1.s8 %v226
    %v573 = vunpack.c.1.s8 %v227
    %v574 = vunpack.c.2.s8 %v226
    %v575 = vunpack.c.2.s8 %v227
    %v576 = vunpack.c.3.s8 %v226
    %v577 = vunpack.c.3.s8 %v227
    %v578 = vunpack.c.0.s8 %v228
    %v579 = vunpack.c.0.s8 %v229
    %v580 = vunpack.c.1.s8 %v228
    %v581 = vunpack.c.1.s8 %v229
    %v582 = vunpack.c.2.s8 %v228
    %v583 = vunpack.c.2.s8 %v229
    %v584 = vunpack.c.3.s8 %v228
    %v585 = vunpack.c.3.s8 %v229
    %v586 = vunpack.c.0.s8 %v230
    %v587 = vunpack.c.0.s8 %v231
    %v588 = vunpack.c.1.s8 %v230
    %v589 = vunpack.c.1.s8 %v231
    %v590 = vunpack.c.2.s8 %v230
    %v591 = vunpack.c.2.s8 %v231
    %v592 = vunpack.c.3.s8 %v230
    %v593 = vunpack.c.3.s8 %v231
    %v594 = vunpack.c.0.s8 %v232
    %v595 = vunpack.c.0.s8 %v233
    %v596 = vunpack.c.1.s8 %v232
    %v597 = vunpack.c.1.s8 %v233
    %v598 = vunpack.c.2.s8 %v232
    %v599 = vunpack.c.2.s8 %v233
    %v600 = vunpack.c.3.s8 %v232
    %v601 = vunpack.c.3.s8 %v233
    %v602 = vunpack.c.0.s8 %v234
    %v603 = vunpack.c.0.s8 %v235
    %v604 = vunpack.c.1.s8 %v234
    %v605 = vunpack.c.1.s8 %v235
    %v606 = vunpack.c.2.s8 %v234
    %v607 = vunpack.c.2.s8 %v235
    %v608 = vunpack.c.3.s8 %v234
    %v609 = vunpack.c.3.s8 %v235
    %v610 = vunpack.c.0.s8 %v236
    %v611 = vunpack.c.0.s8 %v237
    %v612 = vunpack.c.1.s8 %v236
    %v613 = vunpack.c.1.s8 %v237
    %v614 = vunpack.c.2.s8 %v236
    %v615 = vunpack.c.2.s8 %v237
    %v616 = vunpack.c.3.s8 %v236
    %v617 = vunpack.c.3.s8 %v237
    %v618 = vunpack.c.0.s8 %v238
    %v619 = vunpack.c.0.s8 %v239
    %v620 = vunpack.c.1.s8 %v238
    %v621 = vunpack.c.1.s8 %v239
    %v622 = vunpack.c.2.s8 %v238
    %v623 = vunpack.c.2.s8 %v239
    %v624 = vunpack.c.3.s8 %v238
    %v625 = vunpack.c.3.s8 %v239
    %v626 = vunpack.c.0.s8 %v240
    %v627 = vunpack.c.0.s8 %v241
    %v628 = vunpack.c.1.s8 %v240
    %v629 = vunpack.c.1.s8 %v241
    %v630 = vunpack.c.2.s8 %v240
    %v631 = vunpack.c.2.s8 %v241
    %v632 = vunpack.c.3.s8 %v240
    %v633 = vunpack.c.3.s8 %v241
    %v634 = vunpack.c.0.s8 %v242
    %v635 = vunpack.c.0.s8 %v243
    %v636 = vunpack.c.1.s8 %v242
    %v637 = vunpack.c.1.s8 %v243
    %v638 = vunpack.c.2.s8 %v242
    %v639 = vunpack.c.2.s8 %v243
    %v640 = vunpack.c.3.s8 %v242
    %v641 = vunpack.c.3.s8 %v243
    %v642 = vunpack.c.0.s8 %v244
    %v643 = vunpack.c.0.s8 %v245
    %v644 = vunpack.c.1.s8 %v244
    %v645 = vunpack.c.1.s8 %v245
    %v646 = vunpack.c.2.s8 %v244
    %v647 = vunpack.c.2.s8 %v245
    %v648 = vunpack.c.3.s8 %v244
    %v649 = vunpack.c.3.s8 %v245
    %v650 = vunpack.c.0.s8 %v246
    %v651 = vunpack.c.0.s8 %v247
    %v652 = vunpack.c.1.s8 %v246
    %v653 = vunpack.c.1.s8 %v247
    %v654 = vunpack.c.2.s8 %v246
    %v655 = vunpack.c.2.s8 %v247
    %v656 = vunpack.c.3.s8 %v246
    %v657 = vunpack.c.3.s8 %v247
    %v658 = vunpack.c.0.s8 %v248
    %v659 = vunpack.c.0.s8 %v249
    %v660 = vunpack.c.1.s8 %v248
    %v661 = vunpack.c.1.s8 %v249
    %v662 = vunpack.c.2.s8 %v248
    %v663 = vunpack.c.2.s8 %v249
    %v664 = vunpack.c.3.s8 %v248
    %v665 = vunpack.c.3.s8 %v249
    %v666 = vunpack.c.0.s8 %v250
    %v667 = vunpack.c.0.s8 %v251
    %v668 = vunpack.c.1.s8 %v250
    %v669 = vunpack.c.1.s8 %v251
    %v670 = vunpack.c.2.s8 %v250
    %v671 = vunpack.c.2.s8 %v251
    %v672 = vunpack.c.3.s8 %v250
    %v673 = vunpack.c.3.s8 %v251
    %v674 = vunpack.c.0.s8 %v252
    %v675 = vunpack.c.0.s8 %v253
    %v676 = vunpack.c.1.s8 %v252
    %v677 = vunpack.c.1.s8 %v253
    %v678 = vunpack.c.2.s8 %v252
    %v679 = vunpack.c.2.s8 %v253
    %v680 = vunpack.c.3.s8 %v252
    %v681 = vunpack.c.3.s8 %v253
    %v682 = vunpack.c.0.s8 %v254
    %v683 = vunpack.c.0.s8 %v255
    %v684 = vunpack.c.1.s8 %v254
    %v685 = vunpack.c.1.s8 %v255
    %v686 = vunpack.c.2.s8 %v254
    %v687 = vunpack.c.2.s8 %v255
    %v688 = vunpack.c.3.s8 %v254
    %v689 = vunpack.c.3.s8 %v255
    %v690 = vunpack.c.0.s8 %v256
    %v691 = vunpack.c.0.s8 %v257
    %v692 = vunpack.c.1.s8 %v256
    %v693 = vunpack.c.1.s8 %v257
    %v694 = vunpack.c.2.s8 %v256
    %v695 = vunpack.c.2.s8 %v257
    %v696 = vunpack.c.3.s8 %v256
    %v697 = vunpack.c.3.s8 %v257
    %v698 = vunpack.c.0.s8 %v258
    %v699 = vunpack.c.0.s8 %v259
    %v700 = vunpack.c.1.s8 %v258
    %v701 = vunpack.c.1.s8 %v259
    %v702 = vunpack.c.2.s8 %v258
    %v703 = vunpack.c.2.s8 %v259
    %v704 = vunpack.c.3.s8 %v258
    %v705 = vunpack.c.3.s8 %v259
    %v706 = vunpack.c.0.s8 %v260
    %v707 = vunpack.c.0.s8 %v261
    %v708 = vunpack.c.1.s8 %v260
    %v709 = vunpack.c.1.s8 %v261
    %v710 = vunpack.c.2.s8 %v260
    %v711 = vunpack.c.2.s8 %v261
    %v712 = vunpack.c.3.s8 %v260
    %v713 = vunpack.c.3.s8 %v261
    %v714 = vunpack.c.0.s8 %v262
    %v715 = vunpack.c.0.s8 %v263
    %v716 = vunpack.c.1.s8 %v262
    %v717 = vunpack.c.1.s8 %v263
    %v718 = vunpack.c.2.s8 %v262
    %v719 = vunpack.c.2.s8 %v263
    %v720 = vunpack.c.3.s8 %v262
    %v721 = vunpack.c.3.s8 %v263
    %v722 = vunpack.c.0.s8 %v264
    %v723 = vunpack.c.0.s8 %v265
    %v724 = vunpack.c.1.s8 %v264
    %v725 = vunpack.c.1.s8 %v265
    %v726 = vunpack.c.2.s8 %v264
    %v727 = vunpack.c.2.s8 %v265
    %v728 = vunpack.c.3.s8 %v264
    %v729 = vunpack.c.3.s8 %v265
    %v730 = vunpack.c.0.s8 %v266
    %v731 = vunpack.c.0.s8 %v267
    %v732 = vunpack.c.1.s8 %v266
    %v733 = vunpack.c.1.s8 %v267
    %v734 = vunpack.c.2.s8 %v266
    %v735 = vunpack.c.2.s8 %v267
    %v736 = vunpack.c.3.s8 %v266
    %v737 = vunpack.c.3.s8 %v267
    %v738 = vunpack.c.0.s8 %v268
    %v739 = vunpack.c.0.s8 %v269
    %v740 = vunpack.c.1.s8 %v268
    %v741 = vunpack.c.1.s8 %v269
    %v742 = vunpack.c.2.s8 %v268
    %v743 = vunpack.c.2.s8 %v269
    %v744 = vunpack.c.3.s8 %v268
    %v745 = vunpack.c.3.s8 %v269
    %v746 = vunpack.c.0.s8 %v270
    %v747 = vunpack.c.0.s8 %v271
    %v748 = vunpack.c.1.s8 %v270
    %v749 = vunpack.c.1.s8 %v271
    %v750 = vunpack.c.2.s8 %v270
    %v751 = vunpack.c.2.s8 %v271
    %v752 = vunpack.c.3.s8 %v270
    %v753 = vunpack.c.3.s8 %v271
    %v754 = vunpack.c.0.s8 %v272
    %v755 = vunpack.c.0.s8 %v273
    %v756 = vunpack.c.1.s8 %v272
    %v757 = vunpack.c.1.s8 %v273
    %v758 = vunpack.c.2.s8 %v272
    %v759 = vunpack.c.2.s8 %v273
    %v760 = vunpack.c.3.s8 %v272
    %v761 = vunpack.c.3.s8 %v273
    %v762 = vunpack.c.0.s8 %v274
    %v763 = vunpack.c.0.s8 %v275
    %v764 = vunpack.c.1.s8 %v274
    %v765 = vunpack.c.1.s8 %v275
    %v766 = vunpack.c.2.s8 %v274
    %v767 = vunpack.c.2.s8 %v275
    %v768 = vunpack.c.3.s8 %v274
    %v769 = vunpack.c.3.s8 %v275
    %v770 = vunpack.c.0.s8 %v276
    %v771 = vunpack.c.0.s8 %v277
    %v772 = vunpack.c.1.s8 %v276
    %v773 = vunpack.c.1.s8 %v277
    %v774 = vunpack.c.2.s8 %v276
    %v775 = vunpack.c.2.s8 %v277
    %v776 = vunpack.c.3.s8 %v276
    %v777 = vunpack.c.3.s8 %v277
    %v778 = vunpack.c.0.s8 %v278
    %v779 = vunpack.c.0.s8 %v279
    %v780 = vunpack.c.1.s8 %v278
    %v781 = vunpack.c.1.s8 %v279
    %v782 = vunpack.c.2.s8 %v278
    %v783 = vunpack.c.2.s8 %v279
    %v784 = vunpack.c.3.s8 %v278
    %v785 = vunpack.c.3.s8 %v279
    %v786 = vunpack.c.0.s8 %v280
    %v787 = vunpack.c.0.s8 %v281
    %v788 = vunpack.c.1.s8 %v280
    %v789 = vunpack.c.1.s8 %v281
    %v790 = vunpack.c.2.s8 %v280
    %v791 = vunpack.c.2.s8 %v281
    %v792 = vunpack.c.3.s8 %v280
    %v793 = vunpack.c.3.s8 %v281
    %v794 = vcvt.s32.f32 %v282
    %v795 = vcvt.s32.f32 %v283
    %v796 = vcvt.s32.f32 %v284
    %v797 = vcvt.s32.f32 %v285
    %v798 = vcvt.s32.f32 %v286
    %v799 = vcvt.s32.f32 %v287
    %v800 = vcvt.s32.f32 %v288
    %v801 = vcvt.s32.f32 %v289
    %v802 = vcvt.s32.f32 %v290
    %v803 = vcvt.s32.f32 %v291
    %v804 = vcvt.s32.f32 %v292
    %v805 = vcvt.s32.f32 %v293
    %v806 = vcvt.s32.f32 %v294
    %v807 = vcvt.s32.f32 %v295
    %v808 = vcvt.s32.f32 %v296
    %v809 = vcvt.s32.f32 %v297
    %v810 = vcvt.s32.f32 %v298
    %v811 = vcvt.s32.f32 %v299
    %v812 = vcvt.s32.f32 %v300
    %v813 = vcvt.s32.f32 %v301
    %v814 = vcvt.s32.f32 %v302
    %v815 = vcvt.s32.f32 %v303
    %v816 = vcvt.s32.f32 %v304
    %v817 = vcvt.s32.f32 %v305
    %v818 = vcvt.s32.f32 %v306
    %v819 = vcvt.s32.f32 %v307
    %v820 = vcvt.s32.f32 %v308
    %v821 = vcvt.s32.f32 %v309
    %v822 = vcvt.s32.f32 %v310
    %v823 = vcvt.s32.f32 %v311
    %v824 = vcvt.s32.f32 %v312
    %v825 = vcvt.s32.f32 %v313
    %v826 = vcvt.s32.f32 %v314
    %v827 = vcvt.s32.f32 %v315
    %v828 = vcvt.s32.f32 %v316
    %v829 = vcvt.s32.f32 %v317
    %v830 = vcvt.s32.f32 %v318
    %v831 = vcvt.s32.f32 %v319
    %v832 = vcvt.s32.f32 %v320
    %v833 = vcvt.s32.f32 %v321
    %v834 = vcvt.s32.f32 %v322
    %v835 = vcvt.s32.f32 %v323
    %v836 = vcvt.s32.f32 %v324
    %v837 = vcvt.s32.f32 %v325
    %v838 = vcvt.s32.f32 %v326
    %v839 = vcvt.s32.f32 %v327
    %v840 = vcvt.s32.f32 %v328
    %v841 = vcvt.s32.f32 %v329
    %v842 = vcvt.s32.f32 %v330
    %v843 = vcvt.s32.f32 %v331
    %v844 = vcvt.s32.f32 %v332
    %v845 = vcvt.s32.f32 %v333
    %v846 = vcvt.s32.f32 %v334
    %v847 = vcvt.s32.f32 %v335
    %v848 = vcvt.s32.f32 %v336
    %v849 = vcvt.s32.f32 %v337
    %v850 = vcvt.s32.f32 %v338
    %v851 = vcvt.s32.f32 %v339
    %v852 = vcvt.s32.f32 %v340
    %v853 = vcvt.s32.f32 %v341
    %v854 = vcvt.s32.f32 %v342
    %v855 = vcvt.s32.f32 %v343
    %v856 = vcvt.s32.f32 %v344
    %v857 = vcvt.s32.f32 %v345
    %v858 = vcvt.s32.f32 %v346
    %v859 = vcvt.s32.f32 %v347
    %v860 = vcvt.s32.f32 %v348
    %v861 = vcvt.s32.f32 %v349
    %v862 = vcvt.s32.f32 %v350
    %v863 = vcvt.s32.f32 %v351
    %v864 = vcvt.s32.f32 %v352
    %v865 = vcvt.s32.f32 %v353
    %v866 = vcvt.s32.f32 %v354
    %v867 = vcvt.s32.f32 %v355
    %v868 = vcvt.s32.f32 %v356
    %v869 = vcvt.s32.f32 %v357
    %v870 = vcvt.s32.f32 %v358
    %v871 = vcvt.s32.f32 %v359
    %v872 = vcvt.s32.f32 %v360
    %v873 = vcvt.s32.f32 %v361
    %v874 = vcvt.s32.f32 %v362
    %v875 = vcvt.s32.f32 %v363
    %v876 = vcvt.s32.f32 %v364
    %v877 = vcvt.s32.f32 %v365
    %v878 = vcvt.s32.f32 %v366
    %v879 = vcvt.s32.f32 %v367
    %v880 = vcvt.s32.f32 %v368
    %v881 = vcvt.s32.f32 %v369
    %v882 = vcvt.s32.f32 %v370
    %v883 = vcvt.s32.f32 %v371
    %v884 = vcvt.s32.f32 %v372
    %v885 = vcvt.s32.f32 %v373
    %v886 = vcvt.s32.f32 %v374
    %v887 = vcvt.s32.f32 %v375
    %v888 = vcvt.s32.f32 %v376
    %v889 = vcvt.s32.f32 %v377
    %v890 = vcvt.s32.f32 %v378
    %v891 = vcvt.s32.f32 %v379
    %v892 = vcvt.s32.f32 %v380
    %v893 = vcvt.s32.f32 %v381
    %v894 = vcvt.s32.f32 %v382
    %v895 = vcvt.s32.f32 %v383
    %v896 = vcvt.s32.f32 %v384
    %v897 = vcvt.s32.f32 %v385
    %v898 = vcvt.s32.f32 %v386
    %v899 = vcvt.s32.f32 %v387
    %v900 = vcvt.s32.f32 %v388
    %v901 = vcvt.s32.f32 %v389
    %v902 = vcvt.s32.f32 %v390
    %v903 = vcvt.s32.f32 %v391
    %v904 = vcvt.s32.f32 %v392
    %v905 = vcvt.s32.f32 %v393
    %v906 = vcvt.s32.f32 %v394
    %v907 = vcvt.s32.f32 %v395
    %v908 = vcvt.s32.f32 %v396
    %v909 = vcvt.s32.f32 %v397
    %v910 = vcvt.s32.f32 %v398
    %v911 = vcvt.s32.f32 %v399
    %v912 = vcvt.s32.f32 %v400
    %v913 = vcvt.s32.f32 %v401
    %v914 = vcvt.s32.f32 %v402
    %v915 = vcvt.s32.f32 %v403
    %v916 = vcvt.s32.f32 %v404
    %v917 = vcvt.s32.f32 %v405
    %v918 = vcvt.s32.f32 %v406
    %v919 = vcvt.s32.f32 %v407
    %v920 = vcvt.s32.f32 %v408
    %v921 = vcvt.s32.f32 %v409
    %v922 = vcvt.s32.f32 %v410
    %v923 = vcvt.s32.f32 %v411
    %v924 = vcvt.s32.f32 %v412
    %v925 = vcvt.s32.f32 %v413
    %v926 = vcvt.s32.f32 %v414
    %v927 = vcvt.s32.f32 %v415
    %v928 = vcvt.s32.f32 %v416
    %v929 = vcvt.s32.f32 %v417
    %v930 = vcvt.s32.f32 %v418
    %v931 = vcvt.s32.f32 %v419
    %v932 = vcvt.s32.f32 %v420
    %v933 = vcvt.s32.f32 %v421
    %v934 = vcvt.s32.f32 %v422
    %v935 = vcvt.s32.f32 %v423
    %v936 = vcvt.s32.f32 %v424
    %v937 = vcvt.s32.f32 %v425
    %v938 = vcvt.s32.f32 %v426
    %v939 = vcvt.s32.f32 %v427
    %v940 = vcvt.s32.f32 %v428
    %v941 = vcvt.s32.f32 %v429
    %v942 = vcvt.s32.f32 %v430
    %v943 = vcvt.s32.f32 %v431
    %v944 = vcvt.s32.f32 %v432
    %v945 = vcvt.s32.f32 %v433
    %v946 = vcvt.s32.f32 %v434
    %v947 = vcvt.s32.f32 %v435
    %v948 = vcvt.s32.f32 %v436
    %v949 = vcvt.s32.f32 %v437
    %v950 = vcvt.s32.f32 %v438
    %v951 = vcvt.s32.f32 %v439
    %v952 = vcvt.s32.f32 %v440
    %v953 = vcvt.s32.f32 %v441
    %v954 = vcvt.s32.f32 %v442
    %v955 = vcvt.s32.f32 %v443
    %v956 = vcvt.s32.f32 %v444
    %v957 = vcvt.s32.f32 %v445
    %v958 = vcvt.s32.f32 %v446
    %v959 = vcvt.s32.f32 %v447
    %v960 = vcvt.s32.f32 %v448
    %v961 = vcvt.s32.f32 %v449
    %v962 = vcvt.s32.f32 %v450
    %v963 = vcvt.s32.f32 %v451
    %v964 = vcvt.s32.f32 %v452
    %v965 = vcvt.s32.f32 %v453
    %v966 = vcvt.s32.f32 %v454
    %v967 = vcvt.s32.f32 %v455
    %v968 = vcvt.s32.f32 %v456
    %v969 = vcvt.s32.f32 %v457
    %v970 = vcvt.s32.f32 %v458
    %v971 = vcvt.s32.f32 %v459
    %v972 = vcvt.s32.f32 %v460
    %v973 = vcvt.s32.f32 %v461
    %v974 = vcvt.s32.f32 %v462
    %v975 = vcvt.s32.f32 %v463
    %v976 = vcvt.s32.f32 %v464
    %v977 = vcvt.s32.f32 %v465
    %v978 = vcvt.s32.f32 %v466
    %v979 = vcvt.s32.f32 %v467
    %v980 = vcvt.s32.f32 %v468
    %v981 = vcvt.s32.f32 %v469
    %v982 = vcvt.s32.f32 %v470
    %v983 = vcvt.s32.f32 %v471
    %v984 = vcvt.s32.f32 %v472
    %v985 = vcvt.s32.f32 %v473
    %v986 = vcvt.s32.f32 %v474
    %v987 = vcvt.s32.f32 %v475
    %v988 = vcvt.s32.f32 %v476
    %v989 = vcvt.s32.f32 %v477
    %v990 = vcvt.s32.f32 %v478
    %v991 = vcvt.s32.f32 %v479
    %v992 = vcvt.s32.f32 %v480
    %v993 = vcvt.s32.f32 %v481
    %v994 = vcvt.s32.f32 %v482
    %v995 = vcvt.s32.f32 %v483
    %v996 = vcvt.s32.f32 %v484
    %v997 = vcvt.s32.f32 %v485
    %v998 = vcvt.s32.f32 %v486
    %v999 = vcvt.s32.f32 %v487
    %v1000 = vcvt.s32.f32 %v488
    %v1001 = vcvt.s32.f32 %v489
    %v1002 = vcvt.s32.f32 %v490
    %v1003 = vcvt.s32.f32 %v491
    %v1004 = vcvt.s32.f32 %v492
    %v1005 = vcvt.s32.f32 %v493
    %v1006 = vcvt.s32.f32 %v494
    %v1007 = vcvt.s32.f32 %v495
    %v1008 = vcvt.s32.f32 %v496
    %v1009 = vcvt.s32.f32 %v497
    %v1010 = vcvt.s32.f32 %v498
    %v1011 = vcvt.s32.f32 %v499
    %v1012 = vcvt.s32.f32 %v500
    %v1013 = vcvt.s32.f32 %v501
    %v1014 = vcvt.s32.f32 %v502
    %v1015 = vcvt.s32.f32 %v503
    %v1016 = vcvt.s32.f32 %v504
    %v1017 = vcvt.s32.f32 %v505
    %v1018 = vcvt.s32.f32 %v506
    %v1019 = vcvt.s32.f32 %v507
    %v1020 = vcvt.s32.f32 %v508
    %v1021 = vcvt.s32.f32 %v509
    %v1022 = vcvt.s32.f32 %v510
    %v1023 = vcvt.s32.f32 %v511
    %v1024 = vcvt.s32.f32 %v512
    %v1025 = vcvt.s32.f32 %v513
    %v1026 = vcvt.s32.f32 %v514
    %v1027 = vcvt.s32.f32 %v515
    %v1028 = vcvt.s32.f32 %v516
    %v1029 = vcvt.s32.f32 %v517
    %v1030 = vcvt.s32.f32 %v518
    %v1031 = vcvt.s32.f32 %v519
    %v1032 = vcvt.s32.f32 %v520
    %v1033 = vcvt.s32.f32 %v521
    %v1034 = vcvt.s32.f32 %v522
    %v1035 = vcvt.s32.f32 %v523
    %v1036 = vcvt.s32.f32 %v524
    %v1037 = vcvt.s32.f32 %v525
    %v1038 = vcvt.s32.f32 %v526
    %v1039 = vcvt.s32.f32 %v527
    %v1040 = vcvt.s32.f32 %v528
    %v1041 = vcvt.s32.f32 %v529
    %v1042 = vcvt.s32.f32 %v530
    %v1043 = vcvt.s32.f32 %v531
    %v1044 = vcvt.s32.f32 %v532
    %v1045 = vcvt.s32.f32 %v533
    %v1046 = vcvt.s32.f32 %v534
    %v1047 = vcvt.s32.f32 %v535
    %v1048 = vcvt.s32.f32 %v536
    %v1049 = vcvt.s32.f32 %v537
    %v1050 = vcvt.s32.f32 %v538
    %v1051 = vcvt.s32.f32 %v539
    %v1052 = vcvt.s32.f32 %v540
    %v1053 = vcvt.s32.f32 %v541
    %v1054 = vcvt.s32.f32 %v542
    %v1055 = vcvt.s32.f32 %v543
    %v1056 = vcvt.s32.f32 %v544
    %v1057 = vcvt.s32.f32 %v545
    %v1058 = vcvt.s32.f32 %v546
    %v1059 = vcvt.s32.f32 %v547
    %v1060 = vcvt.s32.f32 %v548
    %v1061 = vcvt.s32.f32 %v549
    %v1062 = vcvt.s32.f32 %v550
    %v1063 = vcvt.s32.f32 %v551
    %v1064 = vcvt.s32.f32 %v552
    %v1065 = vcvt.s32.f32 %v553
    %v1066 = vcvt.s32.f32 %v554
    %v1067 = vcvt.s32.f32 %v555
    %v1068 = vcvt.s32.f32 %v556
    %v1069 = vcvt.s32.f32 %v557
    %v1070 = vcvt.s32.f32 %v558
    %v1071 = vcvt.s32.f32 %v559
    %v1072 = vcvt.s32.f32 %v560
    %v1073 = vcvt.s32.f32 %v561
    %v1074 = vcvt.s32.f32 %v562
    %v1075 = vcvt.s32.f32 %v563
    %v1076 = vcvt.s32.f32 %v564
    %v1077 = vcvt.s32.f32 %v565
    %v1078 = vcvt.s32.f32 %v566
    %v1079 = vcvt.s32.f32 %v567
    %v1080 = vcvt.s32.f32 %v568
    %v1081 = vcvt.s32.f32 %v569
    %v1082 = vcvt.s32.f32 %v570
    %v1083 = vcvt.s32.f32 %v571
    %v1084 = vcvt.s32.f32 %v572
    %v1085 = vcvt.s32.f32 %v573
    %v1086 = vcvt.s32.f32 %v574
    %v1087 = vcvt.s32.f32 %v575
    %v1088 = vcvt.s32.f32 %v576
    %v1089 = vcvt.s32.f32 %v577
    %v1090 = vcvt.s32.f32 %v578
    %v1091 = vcvt.s32.f32 %v579
    %v1092 = vcvt.s32.f32 %v580
    %v1093 = vcvt.s32.f32 %v581
    %v1094 = vcvt.s32.f32 %v582
    %v1095 = vcvt.s32.f32 %v583
    %v1096 = vcvt.s32.f32 %v584
    %v1097 = vcvt.s32.f32 %v585
    %v1098 = vcvt.s32.f32 %v586
    %v1099 = vcvt.s32.f32 %v587
    %v1100 = vcvt.s32.f32 %v588
    %v1101 = vcvt.s32.f32 %v589
    %v1102 = vcvt.s32.f32 %v590
    %v1103 = vcvt.s32.f32 %v591
    %v1104 = vcvt.s32.f32 %v592
    %v1105 = vcvt.s32.f32 %v593
    %v1106 = vcvt.s32.f32 %v594
    %v1107 = vcvt.s32.f32 %v595
    %v1108 = vcvt.s32.f32 %v596
    %v1109 = vcvt.s32.f32 %v597
    %v1110 = vcvt.s32.f32 %v598
    %v1111 = vcvt.s32.f32 %v599
    %v1112 = vcvt.s32.f32 %v600
    %v1113 = vcvt.s32.f32 %v601
    %v1114 = vcvt.s32.f32 %v602
    %v1115 = vcvt.s32.f32 %v603
    %v1116 = vcvt.s32.f32 %v604
    %v1117 = vcvt.s32.f32 %v605
    %v1118 = vcvt.s32.f32 %v606
    %v1119 = vcvt.s32.f32 %v607
    %v1120 = vcvt.s32.f32 %v608
    %v1121 = vcvt.s32.f32 %v609
    %v1122 = vcvt.s32.f32 %v610
    %v1123 = vcvt.s32.f32 %v611
    %v1124 = vcvt.s32.f32 %v612
    %v1125 = vcvt.s32.f32 %v613
    %v1126 = vcvt.s32.f32 %v614
    %v1127 = vcvt.s32.f32 %v615
    %v1128 = vcvt.s32.f32 %v616
    %v1129 = vcvt.s32.f32 %v617
    %v1130 = vcvt.s32.f32 %v618
    %v1131 = vcvt.s32.f32 %v619
    %v1132 = vcvt.s32.f32 %v620
    %v1133 = vcvt.s32.f32 %v621
    %v1134 = vcvt.s32.f32 %v622
    %v1135 = vcvt.s32.f32 %v623
    %v1136 = vcvt.s32.f32 %v624
    %v1137 = vcvt.s32.f32 %v625
    %v1138 = vcvt.s32.f32 %v626
    %v1139 = vcvt.s32.f32 %v627
    %v1140 = vcvt.s32.f32 %v628
    %v1141 = vcvt.s32.f32 %v629
    %v1142 = vcvt.s32.f32 %v630
    %v1143 = vcvt.s32.f32 %v631
    %v1144 = vcvt.s32.f32 %v632
    %v1145 = vcvt.s32.f32 %v633
    %v1146 = vcvt.s32.f32 %v634
    %v1147 = vcvt.s32.f32 %v635
    %v1148 = vcvt.s32.f32 %v636
    %v1149 = vcvt.s32.f32 %v637
    %v1150 = vcvt.s32.f32 %v638
    %v1151 = vcvt.s32.f32 %v639
    %v1152 = vcvt.s32.f32 %v640
    %v1153 = vcvt.s32.f32 %v641
    %v1154 = vcvt.s32.f32 %v642
    %v1155 = vcvt.s32.f32 %v643
    %v1156 = vcvt.s32.f32 %v644
    %v1157 = vcvt.s32.f32 %v645
    %v1158 = vcvt.s32.f32 %v646
    %v1159 = vcvt.s32.f32 %v647
    %v1160 = vcvt.s32.f32 %v648
    %v1161 = vcvt.s32.f32 %v649
    %v1162 = vcvt.s32.f32 %v650
    %v1163 = vcvt.s32.f32 %v651
    %v1164 = vcvt.s32.f32 %v652
    %v1165 = vcvt.s32.f32 %v653
    %v1166 = vcvt.s32.f32 %v654
    %v1167 = vcvt.s32.f32 %v655
    %v1168 = vcvt.s32.f32 %v656
    %v1169 = vcvt.s32.f32 %v657
    %v1170 = vcvt.s32.f32 %v658
    %v1171 = vcvt.s32.f32 %v659
    %v1172 = vcvt.s32.f32 %v660
    %v1173 = vcvt.s32.f32 %v661
    %v1174 = vcvt.s32.f32 %v662
    %v1175 = vcvt.s32.f32 %v663
    %v1176 = vcvt.s32.f32 %v664
    %v1177 = vcvt.s32.f32 %v665
    %v1178 = vcvt.s32.f32 %v666
    %v1179 = vcvt.s32.f32 %v667
    %v1180 = vcvt.s32.f32 %v668
    %v1181 = vcvt.s32.f32 %v669
    %v1182 = vcvt.s32.f32 %v670
    %v1183 = vcvt.s32.f32 %v671
    %v1184 = vcvt.s32.f32 %v672
    %v1185 = vcvt.s32.f32 %v673
    %v1186 = vcvt.s32.f32 %v674
    %v1187 = vcvt.s32.f32 %v675
    %v1188 = vcvt.s32.f32 %v676
    %v1189 = vcvt.s32.f32 %v677
    %v1190 = vcvt.s32.f32 %v678
    %v1191 = vcvt.s32.f32 %v679
    %v1192 = vcvt.s32.f32 %v680
    %v1193 = vcvt.s32.f32 %v681
    %v1194 = vcvt.s32.f32 %v682
    %v1195 = vcvt.s32.f32 %v683
    %v1196 = vcvt.s32.f32 %v684
    %v1197 = vcvt.s32.f32 %v685
    %v1198 = vcvt.s32.f32 %v686
    %v1199 = vcvt.s32.f32 %v687
    %v1200 = vcvt.s32.f32 %v688
    %v1201 = vcvt.s32.f32 %v689
    %v1202 = vcvt.s32.f32 %v690
    %v1203 = vcvt.s32.f32 %v691
    %v1204 = vcvt.s32.f32 %v692
    %v1205 = vcvt.s32.f32 %v693
    %v1206 = vcvt.s32.f32 %v694
    %v1207 = vcvt.s32.f32 %v695
    %v1208 = vcvt.s32.f32 %v696
    %v1209 = vcvt.s32.f32 %v697
    %v1210 = vcvt.s32.f32 %v698
    %v1211 = vcvt.s32.f32 %v699
    %v1212 = vcvt.s32.f32 %v700
    %v1213 = vcvt.s32.f32 %v701
    %v1214 = vcvt.s32.f32 %v702
    %v1215 = vcvt.s32.f32 %v703
    %v1216 = vcvt.s32.f32 %v704
    %v1217 = vcvt.s32.f32 %v705
    %v1218 = vcvt.s32.f32 %v706
    %v1219 = vcvt.s32.f32 %v707
    %v1220 = vcvt.s32.f32 %v708
    %v1221 = vcvt.s32.f32 %v709
    %v1222 = vcvt.s32.f32 %v710
    %v1223 = vcvt.s32.f32 %v711
    %v1224 = vcvt.s32.f32 %v712
    %v1225 = vcvt.s32.f32 %v713
    %v1226 = vcvt.s32.f32 %v714
    %v1227 = vcvt.s32.f32 %v715
    %v1228 = vcvt.s32.f32 %v716
    %v1229 = vcvt.s32.f32 %v717
    %v1230 = vcvt.s32.f32 %v718
    %v1231 = vcvt.s32.f32 %v719
    %v1232 = vcvt.s32.f32 %v720
    %v1233 = vcvt.s32.f32 %v721
    %v1234 = vcvt.s32.f32 %v722
    %v1235 = vcvt.s32.f32 %v723
    %v1236 = vcvt.s32.f32 %v724
    %v1237 = vcvt.s32.f32 %v725
    %v1238 = vcvt.s32.f32 %v726
    %v1239 = vcvt.s32.f32 %v727
    %v1240 = vcvt.s32.f32 %v728
    %v1241 = vcvt.s32.f32 %v729
    %v1242 = vcvt.s32.f32 %v730
    %v1243 = vcvt.s32.f32 %v731
    %v1244 = vcvt.s32.f32 %v732
    %v1245 = vcvt.s32.f32 %v733
    %v1246 = vcvt.s32.f32 %v734
    %v1247 = vcvt.s32.f32 %v735
    %v1248 = vcvt.s32.f32 %v736
    %v1249 = vcvt.s32.f32 %v737
    %v1250 = vcvt.s32.f32 %v738
    %v1251 = vcvt.s32.f32 %v739
    %v1252 = vcvt.s32.f32 %v740
    %v1253 = vcvt.s32.f32 %v741
    %v1254 = vcvt.s32.f32 %v742
    %v1255 = vcvt.s32.f32 %v743
    %v1256 = vcvt.s32.f32 %v744
    %v1257 = vcvt.s32.f32 %v745
    %v1258 = vcvt.s32.f32 %v746
    %v1259 = vcvt.s32.f32 %v747
    %v1260 = vcvt.s32.f32 %v748
    %v1261 = vcvt.s32.f32 %v749
    %v1262 = vcvt.s32.f32 %v750
    %v1263 = vcvt.s32.f32 %v751
    %v1264 = vcvt.s32.f32 %v752
    %v1265 = vcvt.s32.f32 %v753
    %v1266 = vcvt.s32.f32 %v754
    %v1267 = vcvt.s32.f32 %v755
    %v1268 = vcvt.s32.f32 %v756
    %v1269 = vcvt.s32.f32 %v757
    %v1270 = vcvt.s32.f32 %v758
    %v1271 = vcvt.s32.f32 %v759
    %v1272 = vcvt.s32.f32 %v760
    %v1273 = vcvt.s32.f32 %v761
    %v1274 = vcvt.s32.f32 %v762
    %v1275 = vcvt.s32.f32 %v763
    %v1276 = vcvt.s32.f32 %v764
    %v1277 = vcvt.s32.f32 %v765
    %v1278 = vcvt.s32.f32 %v766
    %v1279 = vcvt.s32.f32 %v767
    %v1280 = vcvt.s32.f32 %v768
    %v1281 = vcvt.s32.f32 %v769
    %v1282 = vcvt.s32.f32 %v770
    %v1283 = vcvt.s32.f32 %v771
    %v1284 = vcvt.s32.f32 %v772
    %v1285 = vcvt.s32.f32 %v773
    %v1286 = vcvt.s32.f32 %v774
    %v1287 = vcvt.s32.f32 %v775
    %v1288 = vcvt.s32.f32 %v776
    %v1289 = vcvt.s32.f32 %v777
    %v1290 = vcvt.s32.f32 %v778
    %v1291 = vcvt.s32.f32 %v779
    %v1292 = vcvt.s32.f32 %v780
    %v1293 = vcvt.s32.f32 %v781
    %v1294 = vcvt.s32.f32 %v782
    %v1295 = vcvt.s32.f32 %v783
    %v1296 = vcvt.s32.f32 %v784
    %v1297 = vcvt.s32.f32 %v785
    %v1298 = vcvt.s32.f32 %v786
    %v1299 = vcvt.s32.f32 %v787
    %v1300 = vcvt.s32.f32 %v788
    %v1301 = vcvt.s32.f32 %v789
    %v1302 = vcvt.s32.f32 %v790
    %v1303 = vcvt.s32.f32 %v791
    %v1304 = vcvt.s32.f32 %v792
    %v1305 = vcvt.s32.f32 %v793
    %v1306 = vpack.c.bf16 %v796, %v794
    %v1307 = vpack.c.bf16 %v797, %v795
    %v1308 = vpack.c.bf16 %v800, %v798
    %v1309 = vpack.c.bf16 %v801, %v799
    %v1310 = vpack.c.bf16 %v804, %v802
    %v1311 = vpack.c.bf16 %v805, %v803
    %v1312 = vpack.c.bf16 %v808, %v806
    %v1313 = vpack.c.bf16 %v809, %v807
    %v1314 = vpack.c.bf16 %v812, %v810
    %v1315 = vpack.c.bf16 %v813, %v811
    %v1316 = vpack.c.bf16 %v816, %v814
    %v1317 = vpack.c.bf16 %v817, %v815
    %v1318 = vpack.c.bf16 %v820, %v818
    %v1319 = vpack.c.bf16 %v821, %v819
    %v1320 = vpack.c.bf16 %v824, %v822
    %v1321 = vpack.c.bf16 %v825, %v823
    %v1322 = vpack.c.bf16 %v828, %v826
    %v1323 = vpack.c.bf16 %v829, %v827
    %v1324 = vpack.c.bf16 %v832, %v830
    %v1325 = vpack.c.bf16 %v833, %v831
    %v1326 = vpack.c.bf16 %v836, %v834
    %v1327 = vpack.c.bf16 %v837, %v835
    %v1328 = vpack.c.bf16 %v840, %v838
    %v1329 = vpack.c.bf16 %v841, %v839
    %v1330 = vpack.c.bf16 %v844, %v842
    %v1331 = vpack.c.bf16 %v845, %v843
    %v1332 = vpack.c.bf16 %v848, %v846
    %v1333 = vpack.c.bf16 %v849, %v847
    %v1334 = vpack.c.bf16 %v852, %v850
    %v1335 = vpack.c.bf16 %v853, %v851
    %v1336 = vpack.c.bf16 %v856, %v854
    %v1337 = vpack.c.bf16 %v857, %v855
    %v1338 = vpack.c.bf16 %v860, %v858
    %v1339 = vpack.c.bf16 %v861, %v859
    %v1340 = vpack.c.bf16 %v864, %v862
    %v1341 = vpack.c.bf16 %v865, %v863
    %v1342 = vpack.c.bf16 %v868, %v866
    %v1343 = vpack.c.bf16 %v869, %v867
    %v1344 = vpack.c.bf16 %v872, %v870
    %v1345 = vpack.c.bf16 %v873, %v871
    %v1346 = vpack.c.bf16 %v876, %v874
    %v1347 = vpack.c.bf16 %v877, %v875
    %v1348 = vpack.c.bf16 %v880, %v878
    %v1349 = vpack.c.bf16 %v881, %v879
    %v1350 = vpack.c.bf16 %v884, %v882
    %v1351 = vpack.c.bf16 %v885, %v883
    %v1352 = vpack.c.bf16 %v888, %v886
    %v1353 = vpack.c.bf16 %v889, %v887
    %v1354 = vpack.c.bf16 %v892, %v890
    %v1355 = vpack.c.bf16 %v893, %v891
    %v1356 = vpack.c.bf16 %v896, %v894
    %v1357 = vpack.c.bf16 %v897, %v895
    %v1358 = vpack.c.bf16 %v900, %v898
    %v1359 = vpack.c.bf16 %v901, %v899
    %v1360 = vpack.c.bf16 %v904, %v902
    %v1361 = vpack.c.bf16 %v905, %v903
    %v1362 = vpack.c.bf16 %v908, %v906
    %v1363 = vpack.c.bf16 %v909, %v907
    %v1364 = vpack.c.bf16 %v912, %v910
    %v1365 = vpack.c.bf16 %v913, %v911
    %v1366 = vpack.c.bf16 %v916, %v914
    %v1367 = vpack.c.bf16 %v917, %v915
    %v1368 = vpack.c.bf16 %v920, %v918
    %v1369 = vpack.c.bf16 %v921, %v919
    %v1370 = vpack.c.bf16 %v924, %v922
    %v1371 = vpack.c.bf16 %v925, %v923
    %v1372 = vpack.c.bf16 %v928, %v926
    %v1373 = vpack.c.bf16 %v929, %v927
    %v1374 = vpack.c.bf16 %v932, %v930
    %v1375 = vpack.c.bf16 %v933, %v931
    %v1376 = vpack.c.bf16 %v936, %v934
    %v1377 = vpack.c.bf16 %v937, %v935
    %v1378 = vpack.c.bf16 %v940, %v938
    %v1379 = vpack.c.bf16 %v941, %v939
    %v1380 = vpack.c.bf16 %v944, %v942
    %v1381 = vpack.c.bf16 %v945, %v943
    %v1382 = vpack.c.bf16 %v948, %v946
    %v1383 = vpack.c.bf16 %v949, %v947
    %v1384 = vpack.c.bf16 %v952, %v950
    %v1385 = vpack.c.bf16 %v953, %v951
    %v1386 = vpack.c.bf16 %v956, %v954
    %v1387 = vpack.c.bf16 %v957, %v955
    %v1388 = vpack.c.bf16 %v960, %v958
    %v1389 = vpack.c.bf16 %v961, %v959
    %v1390 = vpack.c.bf16 %v964, %v962
    %v1391 = vpack.c.bf16 %v965, %v963
    %v1392 = vpack.c.bf16 %v968, %v966
    %v1393 = vpack.c.bf16 %v969, %v967
    %v1394 = vpack.c.bf16 %v972, %v970
    %v1395 = vpack.c.bf16 %v973, %v971
    %v1396 = vpack.c.bf16 %v976, %v974
    %v1397 = vpack.c.bf16 %v977, %v975
    %v1398 = vpack.c.bf16 %v980, %v978
    %v1399 = vpack.c.bf16 %v981, %v979
    %v1400 = vpack.c.bf16 %v984, %v982
    %v1401 = vpack.c.bf16 %v985, %v983
    %v1402 = vpack.c.bf16 %v988, %v986
    %v1403 = vpack.c.bf16 %v989, %v987
    %v1404 = vpack.c.bf16 %v992, %v990
    %v1405 = vpack.c.bf16 %v993, %v991
    %v1406 = vpack.c.bf16 %v996, %v994
    %v1407 = vpack.c.bf16 %v997, %v995
    %v1408 = vpack.c.bf16 %v1000, %v998
    %v1409 = vpack.c.bf16 %v1001, %v999
    %v1410 = vpack.c.bf16 %v1004, %v1002
    %v1411 = vpack.c.bf16 %v1005, %v1003
    %v1412 = vpack.c.bf16 %v1008, %v1006
    %v1413 = vpack.c.bf16 %v1009, %v1007
    %v1414 = vpack.c.bf16 %v1012, %v1010
    %v1415 = vpack.c.bf16 %v1013, %v1011
    %v1416 = vpack.c.bf16 %v1016, %v1014
    %v1417 = vpack.c.bf16 %v1017, %v1015
    %v1418 = vpack.c.bf16 %v1020, %v1018
    %v1419 = vpack.c.bf16 %v1021, %v1019
    %v1420 = vpack.c.bf16 %v1024, %v1022
    %v1421 = vpack.c.bf16 %v1025, %v1023
    %v1422 = vpack.c.bf16 %v1028, %v1026
    %v1423 = vpack.c.bf16 %v1029, %v1027
    %v1424 = vpack.c.bf16 %v1032, %v1030
    %v1425 = vpack.c.bf16 %v1033, %v1031
    %v1426 = vpack.c.bf16 %v1036, %v1034
    %v1427 = vpack.c.bf16 %v1037, %v1035
    %v1428 = vpack.c.bf16 %v1040, %v1038
    %v1429 = vpack.c.bf16 %v1041, %v1039
    %v1430 = vpack.c.bf16 %v1044, %v1042
    %v1431 = vpack.c.bf16 %v1045, %v1043
    %v1432 = vpack.c.bf16 %v1048, %v1046
    %v1433 = vpack.c.bf16 %v1049, %v1047
    %v1434 = vpack.c.bf16 %v1052, %v1050
    %v1435 = vpack.c.bf16 %v1053, %v1051
    %v1436 = vpack.c.bf16 %v1056, %v1054
    %v1437 = vpack.c.bf16 %v1057, %v1055
    %v1438 = vpack.c.bf16 %v1060, %v1058
    %v1439 = vpack.c.bf16 %v1061, %v1059
    %v1440 = vpack.c.bf16 %v1064, %v1062
    %v1441 = vpack.c.bf16 %v1065, %v1063
    %v1442 = vpack.c.bf16 %v1068, %v1066
    %v1443 = vpack.c.bf16 %v1069, %v1067
    %v1444 = vpack.c.bf16 %v1072, %v1070
    %v1445 = vpack.c.bf16 %v1073, %v1071
    %v1446 = vpack.c.bf16 %v1076, %v1074
    %v1447 = vpack.c.bf16 %v1077, %v1075
    %v1448 = vpack.c.bf16 %v1080, %v1078
    %v1449 = vpack.c.bf16 %v1081, %v1079
    %v1450 = vpack.c.bf16 %v1084, %v1082
    %v1451 = vpack.c.bf16 %v1085, %v1083
    %v1452 = vpack.c.bf16 %v1088, %v1086
    %v1453 = vpack.c.bf16 %v1089, %v1087
    %v1454 = vpack.c.bf16 %v1092, %v1090
    %v1455 = vpack.c.bf16 %v1093, %v1091
    %v1456 = vpack.c.bf16 %v1096, %v1094
    %v1457 = vpack.c.bf16 %v1097, %v1095
    %v1458 = vpack.c.bf16 %v1100, %v1098
    %v1459 = vpack.c.bf16 %v1101, %v1099
    %v1460 = vpack.c.bf16 %v1104, %v1102
    %v1461 = vpack.c.bf16 %v1105, %v1103
    %v1462 = vpack.c.bf16 %v1108, %v1106
    %v1463 = vpack.c.bf16 %v1109, %v1107
    %v1464 = vpack.c.bf16 %v1112, %v1110
    %v1465 = vpack.c.bf16 %v1113, %v1111
    %v1466 = vpack.c.bf16 %v1116, %v1114
    %v1467 = vpack.c.bf16 %v1117, %v1115
    %v1468 = vpack.c.bf16 %v1120, %v1118
    %v1469 = vpack.c.bf16 %v1121, %v1119
    %v1470 = vpack.c.bf16 %v1124, %v1122
    %v1471 = vpack.c.bf16 %v1125, %v1123
    %v1472 = vpack.c.bf16 %v1128, %v1126
    %v1473 = vpack.c.bf16 %v1129, %v1127
    %v1474 = vpack.c.bf16 %v1132, %v1130
    %v1475 = vpack.c.bf16 %v1133, %v1131
    %v1476 = vpack.c.bf16 %v1136, %v1134
    %v1477 = vpack.c.bf16 %v1137, %v1135
    %v1478 = vpack.c.bf16 %v1140, %v1138
    %v1479 = vpack.c.bf16 %v1141, %v1139
    %v1480 = vpack.c.bf16 %v1144, %v1142
    %v1481 = vpack.c.bf16 %v1145, %v1143
    %v1482 = vpack.c.bf16 %v1148, %v1146
    %v1483 = vpack.c.bf16 %v1149, %v1147
    %v1484 = vpack.c.bf16 %v1152, %v1150
    %v1485 = vpack.c.bf16 %v1153, %v1151
    %v1486 = vpack.c.bf16 %v1156, %v1154
    %v1487 = vpack.c.bf16 %v1157, %v1155
    %v1488 = vpack.c.bf16 %v1160, %v1158
    %v1489 = vpack.c.bf16 %v1161, %v1159
    %v1490 = vpack.c.bf16 %v1164, %v1162
    %v1491 = vpack.c.bf16 %v1165, %v1163
    %v1492 = vpack.c.bf16 %v1168, %v1166
    %v1493 = vpack.c.bf16 %v1169, %v1167
    %v1494 = vpack.c.bf16 %v1172, %v1170
    %v1495 = vpack.c.bf16 %v1173, %v1171
    %v1496 = vpack.c.bf16 %v1176, %v1174
    %v1497 = vpack.c.bf16 %v1177, %v1175
    %v1498 = vpack.c.bf16 %v1180, %v1178
    %v1499 = vpack.c.bf16 %v1181, %v1179
    %v1500 = vpack.c.bf16 %v1184, %v1182
    %v1501 = vpack.c.bf16 %v1185, %v1183
    %v1502 = vpack.c.bf16 %v1188, %v1186
    %v1503 = vpack.c.bf16 %v1189, %v1187
    %v1504 = vpack.c.bf16 %v1192, %v1190
    %v1505 = vpack.c.bf16 %v1193, %v1191
    %v1506 = vpack.c.bf16 %v1196, %v1194
    %v1507 = vpack.c.bf16 %v1197, %v1195
    %v1508 = vpack.c.bf16 %v1200, %v1198
    %v1509 = vpack.c.bf16 %v1201, %v1199
    %v1510 = vpack.c.bf16 %v1204, %v1202
    %v1511 = vpack.c.bf16 %v1205, %v1203
    %v1512 = vpack.c.bf16 %v1208, %v1206
    %v1513 = vpack.c.bf16 %v1209, %v1207
    %v1514 = vpack.c.bf16 %v1212, %v1210
    %v1515 = vpack.c.bf16 %v1213, %v1211
    %v1516 = vpack.c.bf16 %v1216, %v1214
    %v1517 = vpack.c.bf16 %v1217, %v1215
    %v1518 = vpack.c.bf16 %v1220, %v1218
    %v1519 = vpack.c.bf16 %v1221, %v1219
    %v1520 = vpack.c.bf16 %v1224, %v1222
    %v1521 = vpack.c.bf16 %v1225, %v1223
    %v1522 = vpack.c.bf16 %v1228, %v1226
    %v1523 = vpack.c.bf16 %v1229, %v1227
    %v1524 = vpack.c.bf16 %v1232, %v1230
    %v1525 = vpack.c.bf16 %v1233, %v1231
    %v1526 = vpack.c.bf16 %v1236, %v1234
    %v1527 = vpack.c.bf16 %v1237, %v1235
    %v1528 = vpack.c.bf16 %v1240, %v1238
    %v1529 = vpack.c.bf16 %v1241, %v1239
    %v1530 = vpack.c.bf16 %v1244, %v1242
    %v1531 = vpack.c.bf16 %v1245, %v1243
    %v1532 = vpack.c.bf16 %v1248, %v1246
    %v1533 = vpack.c.bf16 %v1249, %v1247
    %v1534 = vpack.c.bf16 %v1252, %v1250
    %v1535 = vpack.c.bf16 %v1253, %v1251
    %v1536 = vpack.c.bf16 %v1256, %v1254
    %v1537 = vpack.c.bf16 %v1257, %v1255
    %v1538 = vpack.c.bf16 %v1260, %v1258
    %v1539 = vpack.c.bf16 %v1261, %v1259
    %v1540 = vpack.c.bf16 %v1264, %v1262
    %v1541 = vpack.c.bf16 %v1265, %v1263
    %v1542 = vpack.c.bf16 %v1268, %v1266
    %v1543 = vpack.c.bf16 %v1269, %v1267
    %v1544 = vpack.c.bf16 %v1272, %v1270
    %v1545 = vpack.c.bf16 %v1273, %v1271
    %v1546 = vpack.c.bf16 %v1276, %v1274
    %v1547 = vpack.c.bf16 %v1277, %v1275
    %v1548 = vpack.c.bf16 %v1280, %v1278
    %v1549 = vpack.c.bf16 %v1281, %v1279
    %v1550 = vpack.c.bf16 %v1284, %v1282
    %v1551 = vpack.c.bf16 %v1285, %v1283
    %v1552 = vpack.c.bf16 %v1288, %v1286
    %v1553 = vpack.c.bf16 %v1289, %v1287
    %v1554 = vpack.c.bf16 %v1292, %v1290
    %v1555 = vpack.c.bf16 %v1293, %v1291
    %v1556 = vpack.c.bf16 %v1296, %v1294
    %v1557 = vpack.c.bf16 %v1297, %v1295
    %v1558 = vpack.c.bf16 %v1300, %v1298
    %v1559 = vpack.c.bf16 %v1301, %v1299
    %v1560 = vpack.c.bf16 %v1304, %v1302
    %v1561 = vpack.c.bf16 %v1305, %v1303
    %1562 = vmatpush.bf16.msra.mxu0 %v1320
    %1563 = vmatpush.bf16.msra.mxu0 %v1318
    %1564 = vmatpush.bf16.msra.mxu0 %v1316
    %1565 = vmatpush.bf16.msra.mxu0 %v1314
    %1566 = vmatpush.bf16.msra.mxu0 %v1312
    %1567 = vmatpush.bf16.msra.mxu0 %v1310
    %1568 = vmatpush.bf16.msra.mxu0 %v1308
    %1569 = vmatpush.bf16.msra.mxu0 %v1306
    %1570 = vmatmul.bf16.gmra.mxu0 %v138
    %v1571 = vpop.f32.mrf.mxu0
    %v1572 = vadd.f32 0.0, %v1571
    %v1573 = vpop.f32.mrf.mxu0
    %v1574 = vadd.f32 0.0, %v1573
    %1575 = vdwg.mxu0
    %1576 = vmatpush.bf16.msra.mxu0 %v1336
    %1577 = vmatpush.bf16.msra.mxu0 %v1334
    %1578 = vmatpush.bf16.msra.mxu0 %v1332
    %1579 = vmatpush.bf16.msra.mxu0 %v1330
    %1580 = vmatpush.bf16.msra.mxu0 %v1328
    %1581 = vmatpush.bf16.msra.mxu0 %v1326
    %1582 = vmatpush.bf16.msra.mxu0 %v1324
    %1583 = vmatpush.bf16.msra.mxu0 %v1322
    %1584 = vmatmul.bf16.gmra.mxu0 %v139
    %v1585 = vpop.f32.mrf.mxu0
    %v1586 = vadd.f32 %v1572, %v1585
    %v1587 = vpop.f32.mrf.mxu0
    %v1588 = vadd.f32 %v1574, %v1587
    %1589 = vdwg.mxu0
    %1590 = vmatpush.bf16.msra.mxu0 %v1352
    %1591 = vmatpush.bf16.msra.mxu0 %v1350
    %1592 = vmatpush.bf16.msra.mxu0 %v1348
    %1593 = vmatpush.bf16.msra.mxu0 %v1346
    %1594 = vmatpush.bf16.msra.mxu0 %v1344
    %1595 = vmatpush.bf16.msra.mxu0 %v1342
    %1596 = vmatpush.bf16.msra.mxu0 %v1340
    %1597 = vmatpush.bf16.msra.mxu0 %v1338
    %1598 = vmatmul.bf16.gmra.mxu0 %v140
    %v1599 = vpop.f32.mrf.mxu0
    %v1600 = vadd.f32 %v1586, %v1599
    %v1601 = vpop.f32.mrf.mxu0
    %v1602 = vadd.f32 %v1588, %v1601
    %1603 = vdwg.mxu0
    %1604 = vmatpush.bf16.msra.mxu0 %v1368
    %1605 = vmatpush.bf16.msra.mxu0 %v1366
    %1606 = vmatpush.bf16.msra.mxu0 %v1364
    %1607 = vmatpush.bf16.msra.mxu0 %v1362
    %1608 = vmatpush.bf16.msra.mxu0 %v1360
    %1609 = vmatpush.bf16.msra.mxu0 %v1358
    %1610 = vmatpush.bf16.msra.mxu0 %v1356
    %1611 = vmatpush.bf16.msra.mxu0 %v1354
    %1612 = vmatmul.bf16.gmra.mxu0 %v141
    %v1613 = vpop.f32.mrf.mxu0
    %v1614 = vadd.f32 %v1600, %v1613
    %v1615 = vpop.f32.mrf.mxu0
    %v1616 = vadd.f32 %v1602, %v1615
    %1617 = vdwg.mxu0
    %1618 = vmatpush.bf16.msra.mxu0 %v1384
    %1619 = vmatpush.bf16.msra.mxu0 %v1382
    %1620 = vmatpush.bf16.msra.mxu0 %v1380
    %1621 = vmatpush.bf16.msra.mxu0 %v1378
    %1622 = vmatpush.bf16.msra.mxu0 %v1376
    %1623 = vmatpush.bf16.msra.mxu0 %v1374
    %1624 = vmatpush.bf16.msra.mxu0 %v1372
    %1625 = vmatpush.bf16.msra.mxu0 %v1370
    %1626 = vmatmul.bf16.gmra.mxu0 %v142
    %v1627 = vpop.f32.mrf.mxu0
    %v1628 = vadd.f32 %v1614, %v1627
    %v1629 = vpop.f32.mrf.mxu0
    %v1630 = vadd.f32 %v1616, %v1629
    %1631 = vdwg.mxu0
    %1632 = vmatpush.bf16.msra.mxu0 %v1400
    %1633 = vmatpush.bf16.msra.mxu0 %v1398
    %1634 = vmatpush.bf16.msra.mxu0 %v1396
    %1635 = vmatpush.bf16.msra.mxu0 %v1394
    %1636 = vmatpush.bf16.msra.mxu0 %v1392
    %1637 = vmatpush.bf16.msra.mxu0 %v1390
    %1638 = vmatpush.bf16.msra.mxu0 %v1388
    %1639 = vmatpush.bf16.msra.mxu0 %v1386
    %1640 = vmatmul.bf16.gmra.mxu0 %v143
    %v1641 = vpop.f32.mrf.mxu0
    %v1642 = vadd.f32 %v1628, %v1641
    %v1643 = vpop.f32.mrf.mxu0
    %v1644 = vadd.f32 %v1630, %v1643
    %1645 = vdwg.mxu0
    %1646 = vmatpush.bf16.msra.mxu0 %v1416
    %1647 = vmatpush.bf16.msra.mxu0 %v1414
    %1648 = vmatpush.bf16.msra.mxu0 %v1412
    %1649 = vmatpush.bf16.msra.mxu0 %v1410
    %1650 = vmatpush.bf16.msra.mxu0 %v1408
    %1651 = vmatpush.bf16.msra.mxu0 %v1406
    %1652 = vmatpush.bf16.msra.mxu0 %v1404
    %1653 = vmatpush.bf16.msra.mxu0 %v1402
    %1654 = vmatmul.bf16.gmra.mxu0 %v144
    %v1655 = vpop.f32.mrf.mxu0
    %v1656 = vadd.f32 %v1642, %v1655
    %v1657 = vpop.f32.mrf.mxu0
    %v1658 = vadd.f32 %v1644, %v1657
    %1659 = vdwg.mxu0
    %1660 = vmatpush.bf16.msra.mxu0 %v1432
    %1661 = vmatpush.bf16.msra.mxu0 %v1430
    %1662 = vmatpush.bf16.msra.mxu0 %v1428
    %1663 = vmatpush.bf16.msra.mxu0 %v1426
    %1664 = vmatpush.bf16.msra.mxu0 %v1424
    %1665 = vmatpush.bf16.msra.mxu0 %v1422
    %1666 = vmatpush.bf16.msra.mxu0 %v1420
    %1667 = vmatpush.bf16.msra.mxu0 %v1418
    %1668 = vmatmul.bf16.gmra.mxu0 %v145
    %v1669 = vpop.f32.mrf.mxu0
    %v1670 = vadd.f32 %v1656, %v1669
    %v1671 = vpop.f32.mrf.mxu0
    %v1672 = vadd.f32 %v1658, %v1671
    %1673 = vdwg.mxu0
    %1674 = vmatpush.bf16.msra.mxu0 %v1448
    %1675 = vmatpush.bf16.msra.mxu0 %v1446
    %1676 = vmatpush.bf16.msra.mxu0 %v1444
    %1677 = vmatpush.bf16.msra.mxu0 %v1442
    %1678 = vmatpush.bf16.msra.mxu0 %v1440
    %1679 = vmatpush.bf16.msra.mxu0 %v1438
    %1680 = vmatpush.bf16.msra.mxu0 %v1436
    %1681 = vmatpush.bf16.msra.mxu0 %v1434
    %1682 = vmatmul.bf16.gmra.mxu0 %v146
    %v1683 = vpop.f32.mrf.mxu0
    %v1684 = vadd.f32 %v1670, %v1683
    %v1685 = vpop.f32.mrf.mxu0
    %v1686 = vadd.f32 %v1672, %v1685
    %1687 = vdwg.mxu0
    %1688 = vmatpush.bf16.msra.mxu0 %v1464
    %1689 = vmatpush.bf16.msra.mxu0 %v1462
    %1690 = vmatpush.bf16.msra.mxu0 %v1460
    %1691 = vmatpush.bf16.msra.mxu0 %v1458
    %1692 = vmatpush.bf16.msra.mxu0 %v1456
    %1693 = vmatpush.bf16.msra.mxu0 %v1454
    %1694 = vmatpush.bf16.msra.mxu0 %v1452
    %1695 = vmatpush.bf16.msra.mxu0 %v1450
    %1696 = vmatmul.bf16.gmra.mxu0 %v147
    %v1697 = vpop.f32.mrf.mxu0
    %v1698 = vadd.f32 %v1684, %v1697
    %v1699 = vpop.f32.mrf.mxu0
    %v1700 = vadd.f32 %v1686, %v1699
    %1701 = vdwg.mxu0
    %1702 = vmatpush.bf16.msra.mxu0 %v1480
    %1703 = vmatpush.bf16.msra.mxu0 %v1478
    %1704 = vmatpush.bf16.msra.mxu0 %v1476
    %1705 = vmatpush.bf16.msra.mxu0 %v1474
    %1706 = vmatpush.bf16.msra.mxu0 %v1472
    %1707 = vmatpush.bf16.msra.mxu0 %v1470
    %1708 = vmatpush.bf16.msra.mxu0 %v1468
    %1709 = vmatpush.bf16.msra.mxu0 %v1466
    %1710 = vmatmul.bf16.gmra.mxu0 %v148
    %v1711 = vpop.f32.mrf.mxu0
    %v1712 = vadd.f32 %v1698, %v1711
    %v1713 = vpop.f32.mrf.mxu0
    %v1714 = vadd.f32 %v1700, %v1713
    %1715 = vdwg.mxu0
    %1716 = vmatpush.bf16.msra.mxu0 %v1496
    %1717 = vmatpush.bf16.msra.mxu0 %v1494
    %1718 = vmatpush.bf16.msra.mxu0 %v1492
    %1719 = vmatpush.bf16.msra.mxu0 %v1490
    %1720 = vmatpush.bf16.msra.mxu0 %v1488
    %1721 = vmatpush.bf16.msra.mxu0 %v1486
    %1722 = vmatpush.bf16.msra.mxu0 %v1484
    %1723 = vmatpush.bf16.msra.mxu0 %v1482
    %1724 = vmatmul.bf16.gmra.mxu0 %v149
    %v1725 = vpop.f32.mrf.mxu0
    %v1726 = vadd.f32 %v1712, %v1725
    %v1727 = vpop.f32.mrf.mxu0
    %v1728 = vadd.f32 %v1714, %v1727
    %1729 = vdwg.mxu0
    %1730 = vmatpush.bf16.msra.mxu0 %v1512
    %1731 = vmatpush.bf16.msra.mxu0 %v1510
    %1732 = vmatpush.bf16.msra.mxu0 %v1508
    %1733 = vmatpush.bf16.msra.mxu0 %v1506
    %1734 = vmatpush.bf16.msra.mxu0 %v1504
    %1735 = vmatpush.bf16.msra.mxu0 %v1502
    %1736 = vmatpush.bf16.msra.mxu0 %v1500
    %1737 = vmatpush.bf16.msra.mxu0 %v1498
    %1738 = vmatmul.bf16.gmra.mxu0 %v150
    %v1739 = vpop.f32.mrf.mxu0
    %v1740 = vadd.f32 %v1726, %v1739
    %v1741 = vpop.f32.mrf.mxu0
    %v1742 = vadd.f32 %v1728, %v1741
    %1743 = vdwg.mxu0
    %1744 = vmatpush.bf16.msra.mxu0 %v1528
    %1745 = vmatpush.bf16.msra.mxu0 %v1526
    %1746 = vmatpush.bf16.msra.mxu0 %v1524
    %1747 = vmatpush.bf16.msra.mxu0 %v1522
    %1748 = vmatpush.bf16.msra.mxu0 %v1520
    %1749 = vmatpush.bf16.msra.mxu0 %v1518
    %1750 = vmatpush.bf16.msra.mxu0 %v1516
    %1751 = vmatpush.bf16.msra.mxu0 %v1514
    %1752 = vmatmul.bf16.gmra.mxu0 %v151
    %v1753 = vpop.f32.mrf.mxu0
    %v1754 = vadd.f32 %v1740, %v1753
    %v1755 = vpop.f32.mrf.mxu0
    %v1756 = vadd.f32 %v1742, %v1755
    %1757 = vdwg.mxu0
    %1758 = vmatpush.bf16.msra.mxu0 %v1544
    %1759 = vmatpush.bf16.msra.mxu0 %v1542
    %1760 = vmatpush.bf16.msra.mxu0 %v1540
    %1761 = vmatpush.bf16.msra.mxu0 %v1538
    %1762 = vmatpush.bf16.msra.mxu0 %v1536
    %1763 = vmatpush.bf16.msra.mxu0 %v1534
    %1764 = vmatpush.bf16.msra.mxu0 %v1532
    %1765 = vmatpush.bf16.msra.mxu0 %v1530
    %1766 = vmatmul.bf16.gmra.mxu0 %v152
    %v1767 = vpop.f32.mrf.mxu0
    %v1768 = vadd.f32 %v1754, %v1767
    %v1769 = vpop.f32.mrf.mxu0
    %v1770 = vadd.f32 %v1756, %v1769
    %1771 = vdwg.mxu0
    %1772 = vmatpush.bf16.msra.mxu0 %v1560
    %1773 = vmatpush.bf16.msra.mxu0 %v1558
    %1774 = vmatpush.bf16.msra.mxu0 %v1556
    %1775 = vmatpush.bf16.msra.mxu0 %v1554
    %1776 = vmatpush.bf16.msra.mxu0 %v1552
    %1777 = vmatpush.bf16.msra.mxu0 %v1550
    %1778 = vmatpush.bf16.msra.mxu0 %v1548
    %1779 = vmatpush.bf16.msra.mxu0 %v1546
    %1780 = vmatmul.bf16.gmra.mxu0 %v153
    %v1781 = vpop.f32.mrf.mxu0
    %v1782 = vadd.f32 %v1768, %v1781
    %v1783 = vpop.f32.mrf.mxu0
    %v1784 = vadd.f32 %v1770, %v1783
    %1785 = vdwg.mxu0
    %1786 = vmatpush.bf16.msra.mxu0 %v1321
    %1787 = vmatpush.bf16.msra.mxu0 %v1319
    %1788 = vmatpush.bf16.msra.mxu0 %v1317
    %1789 = vmatpush.bf16.msra.mxu0 %v1315
    %1790 = vmatpush.bf16.msra.mxu0 %v1313
    %1791 = vmatpush.bf16.msra.mxu0 %v1311
    %1792 = vmatpush.bf16.msra.mxu0 %v1309
    %1793 = vmatpush.bf16.msra.mxu0 %v1307
    %1794 = vmatmul.bf16.gmra.mxu0 %v138
    %v1795 = vpop.f32.mrf.mxu0
    %v1796 = vadd.f32 0.0, %v1795
    %v1797 = vpop.f32.mrf.mxu0
    %v1798 = vadd.f32 0.0, %v1797
    %1799 = vdwg.mxu0
    %1800 = vmatpush.bf16.msra.mxu0 %v1337
    %1801 = vmatpush.bf16.msra.mxu0 %v1335
    %1802 = vmatpush.bf16.msra.mxu0 %v1333
    %1803 = vmatpush.bf16.msra.mxu0 %v1331
    %1804 = vmatpush.bf16.msra.mxu0 %v1329
    %1805 = vmatpush.bf16.msra.mxu0 %v1327
    %1806 = vmatpush.bf16.msra.mxu0 %v1325
    %1807 = vmatpush.bf16.msra.mxu0 %v1323
    %1808 = vmatmul.bf16.gmra.mxu0 %v139
    %v1809 = vpop.f32.mrf.mxu0
    %v1810 = vadd.f32 %v1796, %v1809
    %v1811 = vpop.f32.mrf.mxu0
    %v1812 = vadd.f32 %v1798, %v1811
    %1813 = vdwg.mxu0
    %1814 = vmatpush.bf16.msra.mxu0 %v1353
    %1815 = vmatpush.bf16.msra.mxu0 %v1351
    %1816 = vmatpush.bf16.msra.mxu0 %v1349
    %1817 = vmatpush.bf16.msra.mxu0 %v1347
    %1818 = vmatpush.bf16.msra.mxu0 %v1345
    %1819 = vmatpush.bf16.msra.mxu0 %v1343
    %1820 = vmatpush.bf16.msra.mxu0 %v1341
    %1821 = vmatpush.bf16.msra.mxu0 %v1339
    %1822 = vmatmul.bf16.gmra.mxu0 %v140
    %v1823 = vpop.f32.mrf.mxu0
    %v1824 = vadd.f32 %v1810, %v1823
    %v1825 = vpop.f32.mrf.mxu0
    %v1826 = vadd.f32 %v1812, %v1825
    %1827 = vdwg.mxu0
    %1828 = vmatpush.bf16.msra.mxu0 %v1369
    %1829 = vmatpush.bf16.msra.mxu0 %v1367
    %1830 = vmatpush.bf16.msra.mxu0 %v1365
    %1831 = vmatpush.bf16.msra.mxu0 %v1363
    %1832 = vmatpush.bf16.msra.mxu0 %v1361
    %1833 = vmatpush.bf16.msra.mxu0 %v1359
    %1834 = vmatpush.bf16.msra.mxu0 %v1357
    %1835 = vmatpush.bf16.msra.mxu0 %v1355
    %1836 = vmatmul.bf16.gmra.mxu0 %v141
    %v1837 = vpop.f32.mrf.mxu0
    %v1838 = vadd.f32 %v1824, %v1837
    %v1839 = vpop.f32.mrf.mxu0
    %v1840 = vadd.f32 %v1826, %v1839
    %1841 = vdwg.mxu0
    %1842 = vmatpush.bf16.msra.mxu0 %v1385
    %1843 = vmatpush.bf16.msra.mxu0 %v1383
    %1844 = vmatpush.bf16.msra.mxu0 %v1381
    %1845 = vmatpush.bf16.msra.mxu0 %v1379
    %1846 = vmatpush.bf16.msra.mxu0 %v1377
    %1847 = vmatpush.bf16.msra.mxu0 %v1375
    %1848 = vmatpush.bf16.msra.mxu0 %v1373
    %1849 = vmatpush.bf16.msra.mxu0 %v1371
    %1850 = vmatmul.bf16.gmra.mxu0 %v142
    %v1851 = vpop.f32.mrf.mxu0
    %v1852 = vadd.f32 %v1838, %v1851
    %v1853 = vpop.f32.mrf.mxu0
    %v1854 = vadd.f32 %v1840, %v1853
    %1855 = vdwg.mxu0
    %1856 = vmatpush.bf16.msra.mxu0 %v1401
    %1857 = vmatpush.bf16.msra.mxu0 %v1399
    %1858 = vmatpush.bf16.msra.mxu0 %v1397
    %1859 = vmatpush.bf16.msra.mxu0 %v1395
    %1860 = vmatpush.bf16.msra.mxu0 %v1393
    %1861 = vmatpush.bf16.msra.mxu0 %v1391
    %1862 = vmatpush.bf16.msra.mxu0 %v1389
    %1863 = vmatpush.bf16.msra.mxu0 %v1387
    %1864 = vmatmul.bf16.gmra.mxu0 %v143
    %v1865 = vpop.f32.mrf.mxu0
    %v1866 = vadd.f32 %v1852, %v1865
    %v1867 = vpop.f32.mrf.mxu0
    %v1868 = vadd.f32 %v1854, %v1867
    %1869 = vdwg.mxu0
    %1870 = vmatpush.bf16.msra.mxu0 %v1417
    %1871 = vmatpush.bf16.msra.mxu0 %v1415
    %1872 = vmatpush.bf16.msra.mxu0 %v1413
    %1873 = vmatpush.bf16.msra.mxu0 %v1411
    %1874 = vmatpush.bf16.msra.mxu0 %v1409
    %1875 = vmatpush.bf16.msra.mxu0 %v1407
    %1876 = vmatpush.bf16.msra.mxu0 %v1405
    %1877 = vmatpush.bf16.msra.mxu0 %v1403
    %1878 = vmatmul.bf16.gmra.mxu0 %v144
    %v1879 = vpop.f32.mrf.mxu0
    %v1880 = vadd.f32 %v1866, %v1879
    %v1881 = vpop.f32.mrf.mxu0
    %v1882 = vadd.f32 %v1868, %v1881
    %1883 = vdwg.mxu0
    %1884 = vmatpush.bf16.msra.mxu0 %v1433
    %1885 = vmatpush.bf16.msra.mxu0 %v1431
    %1886 = vmatpush.bf16.msra.mxu0 %v1429
    %1887 = vmatpush.bf16.msra.mxu0 %v1427
    %1888 = vmatpush.bf16.msra.mxu0 %v1425
    %1889 = vmatpush.bf16.msra.mxu0 %v1423
    %1890 = vmatpush.bf16.msra.mxu0 %v1421
    %1891 = vmatpush.bf16.msra.mxu0 %v1419
    %1892 = vmatmul.bf16.gmra.mxu0 %v145
    %v1893 = vpop.f32.mrf.mxu0
    %v1894 = vadd.f32 %v1880, %v1893
    %v1895 = vpop.f32.mrf.mxu0
    %v1896 = vadd.f32 %v1882, %v1895
    %1897 = vdwg.mxu0
    %1898 = vmatpush.bf16.msra.mxu0 %v1449
    %1899 = vmatpush.bf16.msra.mxu0 %v1447
    %1900 = vmatpush.bf16.msra.mxu0 %v1445
    %1901 = vmatpush.bf16.msra.mxu0 %v1443
    %1902 = vmatpush.bf16.msra.mxu0 %v1441
    %1903 = vmatpush.bf16.msra.mxu0 %v1439
    %1904 = vmatpush.bf16.msra.mxu0 %v1437
    %1905 = vmatpush.bf16.msra.mxu0 %v1435
    %1906 = vmatmul.bf16.gmra.mxu0 %v146
    %v1907 = vpop.f32.mrf.mxu0
    %v1908 = vadd.f32 %v1894, %v1907
    %v1909 = vpop.f32.mrf.mxu0
    %v1910 = vadd.f32 %v1896, %v1909
    %1911 = vdwg.mxu0
    %1912 = vmatpush.bf16.msra.mxu0 %v1465
    %1913 = vmatpush.bf16.msra.mxu0 %v1463
    %1914 = vmatpush.bf16.msra.mxu0 %v1461
    %1915 = vmatpush.bf16.msra.mxu0 %v1459
    %1916 = vmatpush.bf16.msra.mxu0 %v1457
    %1917 = vmatpush.bf16.msra.mxu0 %v1455
    %1918 = vmatpush.bf16.msra.mxu0 %v1453
    %1919 = vmatpush.bf16.msra.mxu0 %v1451
    %1920 = vmatmul.bf16.gmra.mxu0 %v147
    %v1921 = vpop.f32.mrf.mxu0
    %v1922 = vadd.f32 %v1908, %v1921
    %v1923 = vpop.f32.mrf.mxu0
    %v1924 = vadd.f32 %v1910, %v1923
    %1925 = vdwg.mxu0
    %1926 = vmatpush.bf16.msra.mxu0 %v1481
    %1927 = vmatpush.bf16.msra.mxu0 %v1479
    %1928 = vmatpush.bf16.msra.mxu0 %v1477
    %1929 = vmatpush.bf16.msra.mxu0 %v1475
    %1930 = vmatpush.bf16.msra.mxu0 %v1473
    %1931 = vmatpush.bf16.msra.mxu0 %v1471
    %1932 = vmatpush.bf16.msra.mxu0 %v1469
    %1933 = vmatpush.bf16.msra.mxu0 %v1467
    %1934 = vmatmul.bf16.gmra.mxu0 %v148
    %v1935 = vpop.f32.mrf.mxu0
    %v1936 = vadd.f32 %v1922, %v1935
    %v1937 = vpop.f32.mrf.mxu0
    %v1938 = vadd.f32 %v1924, %v1937
    %1939 = vdwg.mxu0
    %1940 = vmatpush.bf16.msra.mxu0 %v1497
    %1941 = vmatpush.bf16.msra.mxu0 %v1495
    %1942 = vmatpush.bf16.msra.mxu0 %v1493
    %1943 = vmatpush.bf16.msra.mxu0 %v1491
    %1944 = vmatpush.bf16.msra.mxu0 %v1489
    %1945 = vmatpush.bf16.msra.mxu0 %v1487
    %1946 = vmatpush.bf16.msra.mxu0 %v1485
    %1947 = vmatpush.bf16.msra.mxu0 %v1483
    %1948 = vmatmul.bf16.gmra.mxu0 %v149
    %v1949 = vpop.f32.mrf.mxu0
    %v1950 = vadd.f32 %v1936, %v1949
    %v1951 = vpop.f32.mrf.mxu0
    %v1952 = vadd.f32 %v1938, %v1951
    %1953 = vdwg.mxu0
    %1954 = vmatpush.bf16.msra.mxu0 %v1513
    %1955 = vmatpush.bf16.msra.mxu0 %v1511
    %1956 = vmatpush.bf16.msra.mxu0 %v1509
    %1957 = vmatpush.bf16.msra.mxu0 %v1507
    %1958 = vmatpush.bf16.msra.mxu0 %v1505
    %1959 = vmatpush.bf16.msra.mxu0 %v1503
    %1960 = vmatpush.bf16.msra.mxu0 %v1501
    %1961 = vmatpush.bf16.msra.mxu0 %v1499
    %1962 = vmatmul.bf16.gmra.mxu0 %v150
    %v1963 = vpop.f32.mrf.mxu0
    %v1964 = vadd.f32 %v1950, %v1963
    %v1965 = vpop.f32.mrf.mxu0
    %v1966 = vadd.f32 %v1952, %v1965
    %1967 = vdwg.mxu0
    %1968 = vmatpush.bf16.msra.mxu0 %v1529
    %1969 = vmatpush.bf16.msra.mxu0 %v1527
    %1970 = vmatpush.bf16.msra.mxu0 %v1525
    %1971 = vmatpush.bf16.msra.mxu0 %v1523
    %1972 = vmatpush.bf16.msra.mxu0 %v1521
    %1973 = vmatpush.bf16.msra.mxu0 %v1519
    %1974 = vmatpush.bf16.msra.mxu0 %v1517
    %1975 = vmatpush.bf16.msra.mxu0 %v1515
    %1976 = vmatmul.bf16.gmra.mxu0 %v151
    %v1977 = vpop.f32.mrf.mxu0
    %v1978 = vadd.f32 %v1964, %v1977
    %v1979 = vpop.f32.mrf.mxu0
    %v1980 = vadd.f32 %v1966, %v1979
    %1981 = vdwg.mxu0
    %1982 = vmatpush.bf16.msra.mxu0 %v1545
    %1983 = vmatpush.bf16.msra.mxu0 %v1543
    %1984 = vmatpush.bf16.msra.mxu0 %v1541
    %1985 = vmatpush.bf16.msra.mxu0 %v1539
    %1986 = vmatpush.bf16.msra.mxu0 %v1537
    %1987 = vmatpush.bf16.msra.mxu0 %v1535
    %1988 = vmatpush.bf16.msra.mxu0 %v1533
    %1989 = vmatpush.bf16.msra.mxu0 %v1531
    %1990 = vmatmul.bf16.gmra.mxu0 %v152
    %v1991 = vpop.f32.mrf.mxu0
    %v1992 = vadd.f32 %v1978, %v1991
    %v1993 = vpop.f32.mrf.mxu0
    %v1994 = vadd.f32 %v1980, %v1993
    %1995 = vdwg.mxu0
    %1996 = vmatpush.bf16.msra.mxu0 %v1561
    %1997 = vmatpush.bf16.msra.mxu0 %v1559
    %1998 = vmatpush.bf16.msra.mxu0 %v1557
    %1999 = vmatpush.bf16.msra.mxu0 %v1555
    %2000 = vmatpush.bf16.msra.mxu0 %v1553
    %2001 = vmatpush.bf16.msra.mxu0 %v1551
    %2002 = vmatpush.bf16.msra.mxu0 %v1549
    %2003 = vmatpush.bf16.msra.mxu0 %v1547
    %2004 = vmatmul.bf16.gmra.mxu0 %v153
    %v2005 = vpop.f32.mrf.mxu0
    %v2006 = vadd.f32 %v1992, %v2005
    %v2007 = vpop.f32.mrf.mxu0
    %v2008 = vadd.f32 %v1994, %v2007
    %2009 = vdwg.mxu0
    %v2010 = vld [vmem:[#allocation7] sm:$0x3]
    %v2012 = vperm.slane %v2010, 0
    %v2013 = vperm.slane %v2010, 1
    %v2016 = vmul.f32 %v1782, %v2012
    %v2017 = vmul.f32 %v2006, %v2013
    %v2018 = vmul.f32 %v1784, %v2012
    %v2019 = vmul.f32 %v2008, %v2013
    %v2020 = vld [vmem:[%s3] sm:$0x3]
    %v2022 = vperm.slane %v2020, 0
    %v2023 = vperm.slane %v2020, 1
    %v2026 = vadd.f32 %v2016, %v2022
    %v2027 = vadd.f32 %v2017, %v2023
    %v2028 = vadd.f32 %v2018, %v2022
    %v2029 = vadd.f32 %v2019, %v2023
    %vm2030 = vcmp.gt.f32.partialorder %v2026, 0.0
    %vm2031 = vcmp.gt.f32.partialorder %v2027, 0.0
    %vm2032 = vcmp.gt.f32.partialorder %v2028, 0.0
    %vm2033 = vcmp.gt.f32.partialorder %v2029, 0.0
    %v2034 = vmul.f32 %v2026, 0.01
    %v2035 = vmul.f32 %v2027, 0.01
    %v2036 = vmul.f32 %v2028, 0.01
    %v2037 = vmul.f32 %v2029, 0.01
    %v2038 = vsel %vm2030, %v2026, %v2034
    %v2039 = vsel %vm2031, %v2027, %v2035
    %v2040 = vsel %vm2032, %v2028, %v2036
    %v2041 = vsel %vm2033, %v2029, %v2037
    %v2042 = vpack.c.bf16 %v2040, %v2038
    %v2043 = vpack.c.bf16 %v2041, %v2039
    %v2044 = vld [vmem:[#allocation8] sm:$0xf]
    %v2045 = vld [vmem:[#allocation8 + $0x4] sm:$0xf]
    %v2046 = vld [vmem:[#allocation8 + $0x8] sm:$0xf]
    %v2047 = vld [vmem:[#allocation8 + $0xc] sm:$0xf]
    %v2048 = vld [vmem:[#allocation8 + $0x10] sm:$0xf]
    %v2049 = vld [vmem:[#allocation8 + $0x14] sm:$0xf]
    %v2050 = vld [vmem:[#allocation8 + $0x18] sm:$0xf]
    %v2051 = vld [vmem:[#allocation8 + $0x1c] sm:$0xf]
    %v2052 = vld [vmem:[#allocation8 + $0x20] sm:$0xf]
    %v2053 = vld [vmem:[#allocation8 + $0x24] sm:$0xf]
    %v2054 = vld [vmem:[#allocation8 + $0x28] sm:$0xf]
    %v2055 = vld [vmem:[#allocation8 + $0x2c] sm:$0xf]
    %v2056 = vld [vmem:[#allocation8 + $0x30] sm:$0xf]
    %v2057 = vld [vmem:[#allocation8 + $0x34] sm:$0xf]
    %v2058 = vld [vmem:[#allocation8 + $0x38] sm:$0xf]
    %v2059 = vld [vmem:[#allocation8 + $0x3c] sm:$0xf]
    %v2060 = vld [vmem:[#allocation8 + $0x40] sm:$0xf]
    %v2061 = vld [vmem:[#allocation8 + $0x44] sm:$0xf]
    %v2062 = vld [vmem:[#allocation8 + $0x48] sm:$0xf]
    %v2063 = vld [vmem:[#allocation8 + $0x4c] sm:$0xf]
    %v2064 = vld [vmem:[#allocation8 + $0x50] sm:$0xf]
    %v2065 = vld [vmem:[#allocation8 + $0x54] sm:$0xf]
    %v2066 = vld [vmem:[#allocation8 + $0x58] sm:$0xf]
    %v2067 = vld [vmem:[#allocation8 + $0x5c] sm:$0xf]
    %v2068 = vld [vmem:[#allocation8 + $0x60] sm:$0xf]
    %v2069 = vld [vmem:[#allocation8 + $0x64] sm:$0xf]
    %v2070 = vld [vmem:[#allocation8 + $0x68] sm:$0xf]
    %v2071 = vld [vmem:[#allocation8 + $0x6c] sm:$0xf]
    %v2072 = vld [vmem:[#allocation8 + $0x70] sm:$0xf]
    %v2073 = vld [vmem:[#allocation8 + $0x74] sm:$0xf]
    %v2074 = vld [vmem:[#allocation8 + $0x78] sm:$0xf]
    %v2075 = vld [vmem:[#allocation8 + $0x7c] sm:$0xf]
    %v2076 = vld [vmem:[%s5] sm:$0x1]
    %v2078 = vperm.slane %v2076, 0
    %v2112 = vunpack.c.l.b16 %v2044
    %v2113 = vunpack.c.l.b16 %v2045
    %v2114 = vunpack.c.l.b16 %v2046
    %v2115 = vunpack.c.l.b16 %v2047
    %v2116 = vunpack.c.l.b16 %v2048
    %v2117 = vunpack.c.l.b16 %v2049
    %v2118 = vunpack.c.l.b16 %v2050
    %v2119 = vunpack.c.l.b16 %v2051
    %v2120 = vunpack.c.l.b16 %v2052
    %v2121 = vunpack.c.l.b16 %v2053
    %v2122 = vunpack.c.l.b16 %v2054
    %v2123 = vunpack.c.l.b16 %v2055
    %v2124 = vunpack.c.l.b16 %v2056
    %v2125 = vunpack.c.l.b16 %v2057
    %v2126 = vunpack.c.l.b16 %v2058
    %v2127 = vunpack.c.l.b16 %v2059
    %v2128 = vunpack.c.l.b16 %v2060
    %v2129 = vunpack.c.l.b16 %v2061
    %v2130 = vunpack.c.l.b16 %v2062
    %v2131 = vunpack.c.l.b16 %v2063
    %v2132 = vunpack.c.l.b16 %v2064
    %v2133 = vunpack.c.l.b16 %v2065
    %v2134 = vunpack.c.l.b16 %v2066
    %v2135 = vunpack.c.l.b16 %v2067
    %v2136 = vunpack.c.l.b16 %v2068
    %v2137 = vunpack.c.l.b16 %v2069
    %v2138 = vunpack.c.l.b16 %v2070
    %v2139 = vunpack.c.l.b16 %v2071
    %v2140 = vunpack.c.l.b16 %v2072
    %v2141 = vunpack.c.l.b16 %v2073
    %v2142 = vunpack.c.l.b16 %v2074
    %v2143 = vunpack.c.l.b16 %v2075
    %v2144 = vpack.c.b16 %v2113, %v2112
    %v2145 = vpack.c.b16 %v2115, %v2114
    %v2146 = vpack.c.b16 %v2117, %v2116
    %v2147 = vpack.c.b16 %v2119, %v2118
    %v2148 = vpack.c.b16 %v2121, %v2120
    %v2149 = vpack.c.b16 %v2123, %v2122
    %v2150 = vpack.c.b16 %v2125, %v2124
    %v2151 = vpack.c.b16 %v2127, %v2126
    %v2152 = vpack.c.b16 %v2129, %v2128
    %v2153 = vpack.c.b16 %v2131, %v2130
    %v2154 = vpack.c.b16 %v2133, %v2132
    %v2155 = vpack.c.b16 %v2135, %v2134
    %v2156 = vpack.c.b16 %v2137, %v2136
    %v2157 = vpack.c.b16 %v2139, %v2138
    %v2158 = vpack.c.b16 %v2141, %v2140
    %v2159 = vpack.c.b16 %v2143, %v2142
    %2176 = vmatpush.bf16.msra.mxu0 %v2151
    %2177 = vmatpush.bf16.msra.mxu0 %v2150
    %2178 = vmatpush.bf16.msra.mxu0 %v2149
    %2179 = vmatpush.bf16.msra.mxu0 %v2148
    %2180 = vmatpush.bf16.msra.mxu0 %v2147
    %2181 = vmatpush.bf16.msra.mxu0 %v2146
    %2182 = vmatpush.bf16.msra.mxu0 %v2145
    %2183 = vmatpush.bf16.msra.mxu0 %v2144
    %2184 = vmatmul.bf16.gmra.mxu0 %v2042
    %v2185 = vpop.f32.mrf.mxu0
    %v2186 = vadd.f32 %v2078, %v2185
    %v2187 = vpop.f32.mrf.mxu0
    %v2188 = vadd.f32 %v2078, %v2187
    %2189 = vdwg.mxu0
    %2190 = vmatpush.bf16.msra.mxu0 %v2159
    %2191 = vmatpush.bf16.msra.mxu0 %v2158
    %2192 = vmatpush.bf16.msra.mxu0 %v2157
    %2193 = vmatpush.bf16.msra.mxu0 %v2156
    %2194 = vmatpush.bf16.msra.mxu0 %v2155
    %2195 = vmatpush.bf16.msra.mxu0 %v2154
    %2196 = vmatpush.bf16.msra.mxu0 %v2153
    %2197 = vmatpush.bf16.msra.mxu0 %v2152
    %2198 = vmatmul.bf16.gmra.mxu0 %v2043
    %v2199 = vpop.f32.mrf.mxu0
    %v2200 = vadd.f32 %v2186, %v2199
    %v2201 = vpop.f32.mrf.mxu0
    %v2202 = vadd.f32 %v2188, %v2201
    %2203 = vdwg.mxu0
    %vm2204 = vcmp.gt.f32.partialorder %v2200, 0.0
    %vm2205 = vcmp.gt.f32.partialorder %v2202, 0.0
    %v2206 = vmul.f32 %v2200, 0.01
    %v2207 = vmul.f32 %v2202, 0.01
    %v2208 = vsel %vm2204, %v2200, %v2206
    %v2209 = vsel %vm2205, %v2202, %v2207
    %v2210 = vpack.c.bf16 %v2209, %v2208
    %v2211 = vld [vmem:[#allocation10] sm:$0xf]
    %v2212 = vld [vmem:[#allocation10 + $0x4] sm:$0xf]
    %v2213 = vld [vmem:[#allocation10 + $0x8] sm:$0xf]
    %v2214 = vld [vmem:[#allocation10 + $0xc] sm:$0xf]
    %v2215 = vld [vmem:[#allocation10 + $0x10] sm:$0xf]
    %v2216 = vld [vmem:[#allocation10 + $0x14] sm:$0xf]
    %v2217 = vld [vmem:[#allocation10 + $0x18] sm:$0xf]
    %v2218 = vld [vmem:[#allocation10 + $0x1c] sm:$0xf]
    %v2219 = vld [vmem:[#allocation10 + $0x20] sm:$0xf]
    %v2220 = vld [vmem:[#allocation10 + $0x24] sm:$0xf]
    %v2221 = vld [vmem:[#allocation10 + $0x28] sm:$0xf]
    %v2222 = vld [vmem:[#allocation10 + $0x2c] sm:$0xf]
    %v2223 = vld [vmem:[#allocation10 + $0x30] sm:$0xf]
    %v2224 = vld [vmem:[#allocation10 + $0x34] sm:$0xf]
    %v2225 = vld [vmem:[#allocation10 + $0x38] sm:$0xf]
    %v2226 = vld [vmem:[#allocation10 + $0x3c] sm:$0xf]
    %v2227 = vld [vmem:[%s7] sm:$0x1]
    %v2229 = vperm.slane %v2227, 0
    %v2247 = vunpack.c.l.b16 %v2211
    %v2248 = vunpack.c.l.b16 %v2212
    %v2249 = vunpack.c.l.b16 %v2213
    %v2250 = vunpack.c.l.b16 %v2214
    %v2251 = vunpack.c.l.b16 %v2215
    %v2252 = vunpack.c.l.b16 %v2216
    %v2253 = vunpack.c.l.b16 %v2217
    %v2254 = vunpack.c.l.b16 %v2218
    %v2255 = vunpack.c.l.b16 %v2219
    %v2256 = vunpack.c.l.b16 %v2220
    %v2257 = vunpack.c.l.b16 %v2221
    %v2258 = vunpack.c.l.b16 %v2222
    %v2259 = vunpack.c.l.b16 %v2223
    %v2260 = vunpack.c.l.b16 %v2224
    %v2261 = vunpack.c.l.b16 %v2225
    %v2262 = vunpack.c.l.b16 %v2226
    %v2263 = vpack.c.b16 %v2248, %v2247
    %v2264 = vpack.c.b16 %v2250, %v2249
    %v2265 = vpack.c.b16 %v2252, %v2251
    %v2266 = vpack.c.b16 %v2254, %v2253
    %v2267 = vpack.c.b16 %v2256, %v2255
    %v2268 = vpack.c.b16 %v2258, %v2257
    %v2269 = vpack.c.b16 %v2260, %v2259
    %v2270 = vpack.c.b16 %v2262, %v2261
    %2279 = vmatpush.bf16.msra.mxu0 %v2270
    %2280 = vmatpush.bf16.msra.mxu0 %v2269
    %2281 = vmatpush.bf16.msra.mxu0 %v2268
    %2282 = vmatpush.bf16.msra.mxu0 %v2267
    %2283 = vmatpush.bf16.msra.mxu0 %v2266
    %2284 = vmatpush.bf16.msra.mxu0 %v2265
    %2285 = vmatpush.bf16.msra.mxu0 %v2264
    %2286 = vmatpush.bf16.msra.mxu0 %v2263
    %2287 = vmatmul.bf16.gmra.mxu0 %v2210
    %v2288 = vpop.f32.mrf.mxu0
    %v2289 = vadd.f32 %v2229, %v2288
    %v2290 = vpop.f32.mrf.mxu0
    %v2291 = vadd.f32 %v2229, %v2290
    %2292 = vdwg.mxu0
    %2293 = vst [vmem:[#allocation11] sm:$0xff] %v2289
    %2294 = vst [vmem:[#allocation11 + $0x8] sm:$0xff] %v2291
    // Predicated region
    $region54: #{tpu_custom_call.1} parent=1 // pred_check
      _
    $region55: #{tpu_custom_call.1} parent=1 // pred_check_branch
      %2296 = sbr.rel (0) target = $region57
    $region56: #{tpu_custom_call.1} parent=1 // pred_region
      %2298 = vsyncadd [#allocation4], 0
      %s2299 = sshll.u32 [#allocation11], 4
      %s2300 = int_to_ptr.vmem [resolvable:$true] %s2299
      %s2301 = sshll.u32 %s8, 4
      %s2302 = int_to_ptr.hbm [resolvable:$true] %s2301
      %2307 = dma.vmem_to_hbm [thread:$0]  %s2300, 256, %s2302, [#allocation4], 128, 128, 8
    $region57: #{tpu_custom_call.1} parent=1 // pred_fallthru
      _
    // Predicated region
    $region58: #{tpu_custom_call.1} parent=1 // pred_check
      _
    $region59: #{tpu_custom_call.1} parent=1 // pred_check_branch
      %2309 = sbr.rel (0) target = $region61
    $region60: #{tpu_custom_call.1} parent=1 // pred_region
      %2311 = dma.done [#allocation4], 256
    $region61: #{tpu_custom_call.1} parent=1 // pred_fallthru
      _
    %2312 = vsyncpa [#allocation3], 1
    %2313 = vsyncpa [#allocation6], 1
    %2314 = vsyncpa [#allocation9], 1
    %2315 = vsyncpa [#allocation4], 1

</llo_original>
